<compile_context>
chip_gen: v7x
topology: tpu7x:2x2x1
jax: 0.10.0
libtpu: 0.0.40
codegen_flags: <defaults>
</compile_context>

<pallas_src>
import math
import numpy as np

import jax
import jax.numpy as jnp
from jax import lax
from jax.experimental import pallas as pl
from jax.experimental.pallas import tpu as pltpu


# --------------------------------------------------------------------------
# Layer widths (lane-padded to multiples of 128)
# --------------------------------------------------------------------------
K0 = 4 * 16 * 16   # 1024 : flattened NCHW pixel state
N1 = 512           # conv1 output  7*7*8  = 392 -> 512
N2 = 256           # conv2 output  3*3*16 = 144 -> 256
N3 = 128           # trunk feature          20 -> 128
N4 = 128           # critic hidden          20 -> 128
N5 = 128           # critic value            1 -> 128 (lane 0 is the value)

_SMALL_BATCH_MAX = 256   # single-invocation (no-grid) path up to here
_BM = 256                # batch tile for the grid path (B > 256)


# --------------------------------------------------------------------------
# Fused Pallas kernel: the whole Critic forward in one invocation
# --------------------------------------------------------------------------
def _fused_critic_kernel(x_ref, a1_ref, b1_ref, a2_ref, b2_ref,
                         fw_ref, fb_ref, hw1_ref, hb1_ref, hw2_ref, hb2_ref,
                         o_ref):
    """y1 = relu(x  @ A1 + b1)   (B,1024)->(B,512)
       y2 = relu(y1 @ A2 + b2)   (B, 512)->(B,256)
       f  = relu(y2 @ Fw + fb)   (B, 256)->(B,128)
       h  = tanh(f  @ W1 + c1)   (B, 128)->(B,128)   (critic head)
       v  =      h  @ W2 + c2    (B, 128)->(B,128)   (lane 0 = value)
    All MXU feeds are bf16 with f32 accumulation; all elementwise math is f32.
    Padded lanes stay exactly zero (zero-padded weights/biases, ReLU(0)=0,
    tanh(0)=0), so they never contaminate the real lanes.
    """
    x = x_ref[...].astype(jnp.bfloat16)                          # (B,1024) bf16

    y1 = jnp.dot(x, a1_ref[...], preferred_element_type=jnp.float32)
    y1 = jnp.maximum(y1 + b1_ref[...], 0.0)                      # (B, 512) f32

    y2 = jnp.dot(y1.astype(jnp.bfloat16), a2_ref[...],
                 preferred_element_type=jnp.float32)
    y2 = jnp.maximum(y2 + b2_ref[...], 0.0)                      # (B, 256) f32

    f = jnp.dot(y2.astype(jnp.bfloat16), fw_ref[...],
                preferred_element_type=jnp.float32)
    f = jnp.maximum(f + fb_ref[...], 0.0)                        # (B, 128) f32

    h = jnp.dot(f.astype(jnp.bfloat16), hw1_ref[...],
                preferred_element_type=jnp.float32)
    h = jnp.tanh(h + hb1_ref[...])                               # (B, 128) f32

    v = jnp.dot(h.astype(jnp.bfloat16), hw2_ref[...],
                preferred_element_type=jnp.float32)
    o_ref[...] = (v + hb2_ref[...]).astype(o_ref.dtype)          # (B, 128)


def _cost_estimate(rows, args):
    flops = 2 * rows * (K0 * N1 + N1 * N2 + N2 * N3 + N3 * N4 + N4 * N5)
    transcendentals = rows * N4                                  # tanh
    bytes_accessed = sum(int(np.prod(a.shape)) * a.dtype.itemsize for a in args)
    bytes_accessed += rows * N5 * 4                              # output
    return pl.CostEstimate(flops=flops, transcendentals=transcendentals,
                           bytes_accessed=bytes_accessed)


def critic_forward(params, state):
    """state: (B, 4, 16, 16) NCHW -> value (B, 1)."""
    B = state.shape[0]
    x = state.reshape(B, -1)            # metadata-only NCHW flatten, no dtype pass
    weights = (params["a1"], params["b1"], params["a2"], params["b2"],
               params["fw"], params["fb"], params["hw1"], params["hb1"],
               params["hw2"], params["hb2"])

    if B <= _SMALL_BATCH_MAX:
        # Small/medium batch (the A2C use case, B=2): single invocation, no
        # grid, everything resident in VMEM (~4 MiB max), no pipeline
        # bookkeeping.  This path is pure weight-DMA + launch-overhead bound.
        args = (x,) + weights
        vmem = pl.BlockSpec(memory_space=pltpu.MemorySpace.VMEM)
        out = pl.pallas_call(
            _fused_critic_kernel,
            out_shape=jax.ShapeDtypeStruct((B, N5), jnp.float32),
            in_specs=[vmem] * len(args),
            out_specs=vmem,
            cost_estimate=_cost_estimate(B, args),
            compiler_params=pltpu.CompilerParams(
                vmem_limit_bytes=32 * 1024 * 1024),
        )(*args)
        return out[:, :1]

    # Large-batch throughput path: bm=256 tiles (never 8), batch padded up to a
    # multiple of bm, >= 2 grid steps by construction (B > 256) so
    # ("parallel",) shards across both TensorCores on v7x.
    bm = _BM
    Bp = ((B + bm - 1) // bm) * bm
    if Bp != B:
        x = jnp.pad(x, ((0, Bp - B), (0, 0)))
    args = (x,) + weights

    x_spec = pl.BlockSpec((bm, K0), lambda i: (i, 0))
    # Grid-invariant operands: single-buffered (block index never changes).
    w_specs = [pl.BlockSpec(w.shape, lambda i: (0, 0),
                            pipeline_mode=pl.Buffered(1)) for w in weights]

    out = pl.pallas_call(
        _fused_critic_kernel,
        out_shape=jax.ShapeDtypeStruct((Bp, N5), jnp.float32),
        grid=(Bp // bm,),
        in_specs=[x_spec] + w_specs,
        out_specs=pl.BlockSpec((bm, N5), lambda i: (i, 0)),
        cost_estimate=_cost_estimate(Bp, args),
        compiler_params=pltpu.CompilerParams(
            dimension_semantics=("parallel",),
            vmem_limit_bytes=32 * 1024 * 1024),
    )(*args)

    return out[:B, :1]   # lane 0 of the padded output is the critic value


# --------------------------------------------------------------------------
# Parameter construction: fold convs to dense matmuls, lane-pad, bf16-pack
# --------------------------------------------------------------------------
def _orthogonal(key, shape, gain):
    """PyTorch-style orthogonal init on a 2-D (out, in) matrix."""
    return np.asarray(
        jax.nn.initializers.orthogonal(scale=gain)(key, shape, jnp.float32))


def _fold_conv(w, b, in_hw, stride, in_layout):
    """Pre-lower a VALID, stride-`stride` conv to (dense matrix, bias row).

    Input activation layout per sample : flattened `in_layout` ("CHW"/"HWC").
    Output activation layout per sample: flattened HWC, column (oh*OW+ow)*O+o.
    y_flat = x_flat @ A + bias  reproduces the conv exactly (it is linear).
    """
    O, C, k, _ = w.shape
    H = W = in_hw
    OH = OW = (H - k) // stride + 1
    A = np.zeros((C * H * W, OH * OW * O), dtype=np.float32)
    for oh in range(OH):
        for ow in range(OW):
            p = oh * OW + ow
            for i in range(k):
                for j in range(k):
                    h = oh * stride + i
                    ww = ow * stride + j
                    for c in range(C):
                        if in_layout == "CHW":
                            src = c * H * W + h * W + ww
                        else:                       # "HWC"
                            src = (h * W + ww) * C + c
                        A[src, p * O:(p + 1) * O] = w[:, c, i, j]
    bias = np.tile(b, OH * OW).astype(np.float32)   # column (p*O+o) -> b[o]
    return A, bias


def _pad2(a, rows, cols):
    out = np.zeros((rows, cols), dtype=a.dtype)
    out[:a.shape[0], :a.shape[1]] = a
    return out


def _pad_bias(b, cols):
    out = np.zeros((1, cols), dtype=np.float32)
    out[0, :b.shape[0]] = b
    return out


def make_params(key):
    gain = math.sqrt(2.0)
    ks = jax.random.split(key, 5)

    # --- raw (PyTorch-layout) parameters -------------------------------
    # Trunk ("actor.common" stand-in).  Ortho init applied on the 2-D
    # (out, in*k*k) flattening, matching nn.init.orthogonal_ on conv weights.
    w1 = _orthogonal(ks[0], (8, 4 * 9), gain).reshape(8, 4, 3, 3)
    b1 = np.zeros((8,), np.float32)
    w2 = _orthogonal(ks[1], (16, 8 * 9), gain).reshape(16, 8, 3, 3)
    b2 = np.zeros((16,), np.float32)
    fw = _orthogonal(ks[2], (20, 144), gain).T          # used as x @ fw
    fb = np.zeros((20,), np.float32)
    # Critic head (the module's own compute): Linear(20,20)->Tanh->Linear(20,1)
    hw1 = _orthogonal(ks[3], (20, 20), gain).T
    hb1 = np.zeros((20,), np.float32)
    hw2 = _orthogonal(ks[4], (1, 20), gain).T           # (20, 1)
    hb2 = np.zeros((1,), np.float32)

    raw = dict(w1=w1, b1=b1, w2=w2, b2=b2, fw=fw, fb=fb,
               hw1=hw1, hb1=hb1, hw2=hw2, hb2=hb2)

    # --- pre-lowered, lane-padded, bf16-packed kernel parameters --------
    a1, b1c = _fold_conv(w1, b1, in_hw=16, stride=2, in_layout="CHW")  # (1024,392)
    a2, b2c = _fold_conv(w2, b2, in_hw=7, stride=2, in_layout="HWC")   # (392,144)
    # fw rows are indexed by the PyTorch NCHW flatten (c*9 + p); reorder to the
    # kernel's HWC flatten (p*16 + c) so no relayout is needed in-kernel.
    perm = np.array([(q % 16) * 9 + (q // 16) for q in range(144)])
    fw_hwc = fw[perm, :]

    # NOTE: the padded-lane-zero invariant relies on padded weight/bias lanes
    # being exactly zero; keep that in mind if loading external checkpoints.
    params = {
        "a1": jnp.asarray(_pad2(a1, K0, N1), dtype=jnp.bfloat16),
        "b1": jnp.asarray(_pad_bias(b1c, N1)),
        "a2": jnp.asarray(_pad2(a2, N1, N2), dtype=jnp.bfloat16),
        "b2": jnp.asarray(_pad_bias(b2c, N2)),
        "fw": jnp.asarray(_pad2(fw_hwc, N2, N3), dtype=jnp.bfloat16),
        "fb": jnp.asarray(_pad_bias(fb, N3)),
        "hw1": jnp.asarray(_pad2(hw1, N3, N4), dtype=jnp.bfloat16),
        "hb1": jnp.asarray(_pad_bias(hb1, N4)),
        "hw2": jnp.asarray(_pad2(hw2, N4, N5), dtype=jnp.bfloat16),
        "hb2": jnp.asarray(_pad_bias(hb2, N5)),
    }
    return params, raw


# --------------------------------------------------------------------------
# Pure-JAX reference (real convs) for a structural sanity check
# --------------------------------------------------------------------------
def reference_forward(raw, state):
    dn = ("NCHW", "OIHW", "NCHW")
    x = lax.conv_general_dilated(state, jnp.asarray(raw["w1"]),
                                 window_strides=(2, 2), padding="VALID",
                                 dimension_numbers=dn)
    x = jax.nn.relu(x + jnp.asarray(raw["b1"]).reshape(1, -1, 1, 1))
    x = lax.conv_general_dilated(x, jnp.asarray(raw["w2"]),
                                 window_strides=(2, 2), padding="VALID",
                                 dimension_numbers=dn)
    x = jax.nn.relu(x + jnp.asarray(raw["b2"]).reshape(1, -1, 1, 1))
    x = x.reshape(x.shape[0], -1)
    x = jax.nn.relu(x @ jnp.asarray(raw["fw"]) + jnp.asarray(raw["fb"]))
    h = jnp.tanh(x @ jnp.asarray(raw["hw1"]) + jnp.asarray(raw["hb1"]))
    return h @ jnp.asarray(raw["hw2"]) + jnp.asarray(raw["hb2"])


if __name__ == "__main__":
    key = jax.random.PRNGKey(0)
    pkey, xkey = jax.random.split(key)
    params, raw = make_params(pkey)

    # layout: NCHW state (B=2, C=4, H=16, W=16)
    state = jax.random.normal(xkey, (2, 4, 16, 16), dtype=jnp.float32)

    fwd = jax.jit(critic_forward)
    value = jax.block_until_ready(fwd(params, state))
    assert value.shape == (2, 1), value.shape
    assert value.dtype == jnp.float32

    # Structural sanity check against real convs (tolerance covers the bf16
    # MXU feeds; errors are ~1e-2 scale).
    ref = jax.block_until_ready(reference_forward(raw, state))
    np.testing.assert_allclose(np.asarray(value), np.asarray(ref),
                               rtol=1e-1, atol=1.5e-1)

    print("KERNEL_OK")
</pallas_src>

<mosaic_0001>
module attributes {stable_mosaic.version = 11 : i64} {
  func.func @_fused_critic_kernel(%arg0: memref<2x1024xf32, #tpu.memory_space<vmem>>, %arg1: memref<1024x512xbf16, #tpu.memory_space<vmem>>, %arg2: memref<1x512xf32, #tpu.memory_space<vmem>>, %arg3: memref<512x256xbf16, #tpu.memory_space<vmem>>, %arg4: memref<1x256xf32, #tpu.memory_space<vmem>>, %arg5: memref<256x128xbf16, #tpu.memory_space<vmem>>, %arg6: memref<1x128xf32, #tpu.memory_space<vmem>>, %arg7: memref<128x128xbf16, #tpu.memory_space<vmem>>, %arg8: memref<1x128xf32, #tpu.memory_space<vmem>>, %arg9: memref<128x128xbf16, #tpu.memory_space<vmem>>, %arg10: memref<1x128xf32, #tpu.memory_space<vmem>>, %arg11: memref<2x128xf32, #tpu.memory_space<vmem>>) attributes {dimension_semantics = [], scalar_prefetch = 0 : i64, scratch_operands = 0 : i64, tpu.core_type = #tpu.core_type<tc>} {
    %c0 = arith.constant 0 : index
    %c0_0 = arith.constant 0 : index
    %0 = vector.load %arg0[%c0, %c0_0] : memref<2x1024xf32, #tpu.memory_space<vmem>>, vector<2x1024xf32>
    %1 = arith.truncf %0 : vector<2x1024xf32> to vector<2x1024xbf16>
    %c0_1 = arith.constant 0 : index
    %c0_2 = arith.constant 0 : index
    %2 = vector.load %arg1[%c0_1, %c0_2] : memref<1024x512xbf16, #tpu.memory_space<vmem>>, vector<1024x512xbf16>
    %cst = arith.constant dense<0.000000e+00> : vector<2x512xf32>
    %3 = tpu.matmul %1, %2, %cst {dimension_numbers = #tpu.dot_dimension_numbers<[1], [0], [0], [1], [0, 0, 1, 1], [], []>} : vector<2x1024xbf16>, vector<1024x512xbf16>, vector<2x512xf32> -> vector<2x512xf32>
    %c0_3 = arith.constant 0 : index
    %c0_4 = arith.constant 0 : index
    %4 = vector.load %arg2[%c0_3, %c0_4] : memref<1x512xf32, #tpu.memory_space<vmem>>, vector<1x512xf32>
    %5 = vector.broadcast %4 : vector<1x512xf32> to vector<2x512xf32>
    %6 = arith.addf %3, %5 : vector<2x512xf32>
    %cst_5 = arith.constant 0.000000e+00 : f32
    %7 = vector.broadcast %cst_5 : f32 to vector<2x512xf32>
    %8 = arith.maximumf %6, %7 : vector<2x512xf32>
    %9 = arith.truncf %8 : vector<2x512xf32> to vector<2x512xbf16>
    %c0_6 = arith.constant 0 : index
    %c0_7 = arith.constant 0 : index
    %10 = vector.load %arg3[%c0_6, %c0_7] : memref<512x256xbf16, #tpu.memory_space<vmem>>, vector<512x256xbf16>
    %cst_8 = arith.constant dense<0.000000e+00> : vector<2x256xf32>
    %11 = tpu.matmul %9, %10, %cst_8 {dimension_numbers = #tpu.dot_dimension_numbers<[1], [0], [0], [1], [0, 0, 1, 1], [], []>} : vector<2x512xbf16>, vector<512x256xbf16>, vector<2x256xf32> -> vector<2x256xf32>
    %c0_9 = arith.constant 0 : index
    %c0_10 = arith.constant 0 : index
    %12 = vector.load %arg4[%c0_9, %c0_10] : memref<1x256xf32, #tpu.memory_space<vmem>>, vector<1x256xf32>
    %13 = vector.broadcast %12 : vector<1x256xf32> to vector<2x256xf32>
    %14 = arith.addf %11, %13 : vector<2x256xf32>
    %cst_11 = arith.constant 0.000000e+00 : f32
    %15 = vector.broadcast %cst_11 : f32 to vector<2x256xf32>
    %16 = arith.maximumf %14, %15 : vector<2x256xf32>
    %17 = arith.truncf %16 : vector<2x256xf32> to vector<2x256xbf16>
    %c0_12 = arith.constant 0 : index
    %c0_13 = arith.constant 0 : index
    %18 = vector.load %arg5[%c0_12, %c0_13] : memref<256x128xbf16, #tpu.memory_space<vmem>>, vector<256x128xbf16>
    %cst_14 = arith.constant dense<0.000000e+00> : vector<2x128xf32>
    %19 = tpu.matmul %17, %18, %cst_14 {dimension_numbers = #tpu.dot_dimension_numbers<[1], [0], [0], [1], [0, 0, 1, 1], [], []>} : vector<2x256xbf16>, vector<256x128xbf16>, vector<2x128xf32> -> vector<2x128xf32>
    %c0_15 = arith.constant 0 : index
    %c0_16 = arith.constant 0 : index
    %20 = vector.load %arg6[%c0_15, %c0_16] : memref<1x128xf32, #tpu.memory_space<vmem>>, vector<1x128xf32>
    %21 = vector.broadcast %20 : vector<1x128xf32> to vector<2x128xf32>
    %22 = arith.addf %19, %21 : vector<2x128xf32>
    %cst_17 = arith.constant 0.000000e+00 : f32
    %23 = vector.broadcast %cst_17 : f32 to vector<2x128xf32>
    %24 = arith.maximumf %22, %23 : vector<2x128xf32>
    %25 = arith.truncf %24 : vector<2x128xf32> to vector<2x128xbf16>
    %c0_18 = arith.constant 0 : index
    %c0_19 = arith.constant 0 : index
    %26 = vector.load %arg7[%c0_18, %c0_19] : memref<128x128xbf16, #tpu.memory_space<vmem>>, vector<128x128xbf16>
    %cst_20 = arith.constant dense<0.000000e+00> : vector<2x128xf32>
    %27 = tpu.matmul %25, %26, %cst_20 {dimension_numbers = #tpu.dot_dimension_numbers<[1], [0], [0], [1], [0, 0, 1, 1], [], []>} : vector<2x128xbf16>, vector<128x128xbf16>, vector<2x128xf32> -> vector<2x128xf32>
    %c0_21 = arith.constant 0 : index
    %c0_22 = arith.constant 0 : index
    %28 = vector.load %arg8[%c0_21, %c0_22] : memref<1x128xf32, #tpu.memory_space<vmem>>, vector<1x128xf32>
    %29 = vector.broadcast %28 : vector<1x128xf32> to vector<2x128xf32>
    %30 = arith.addf %27, %29 : vector<2x128xf32>
    %31 = math.tanh %30 : vector<2x128xf32>
    %32 = arith.truncf %31 : vector<2x128xf32> to vector<2x128xbf16>
    %c0_23 = arith.constant 0 : index
    %c0_24 = arith.constant 0 : index
    %33 = vector.load %arg9[%c0_23, %c0_24] : memref<128x128xbf16, #tpu.memory_space<vmem>>, vector<128x128xbf16>
    %cst_25 = arith.constant dense<0.000000e+00> : vector<2x128xf32>
    %34 = tpu.matmul %32, %33, %cst_25 {dimension_numbers = #tpu.dot_dimension_numbers<[1], [0], [0], [1], [0, 0, 1, 1], [], []>} : vector<2x128xbf16>, vector<128x128xbf16>, vector<2x128xf32> -> vector<2x128xf32>
    %c0_26 = arith.constant 0 : index
    %c0_27 = arith.constant 0 : index
    %35 = vector.load %arg10[%c0_26, %c0_27] : memref<1x128xf32, #tpu.memory_space<vmem>>, vector<1x128xf32>
    %36 = vector.broadcast %35 : vector<1x128xf32> to vector<2x128xf32>
    %37 = arith.addf %34, %36 : vector<2x128xf32>
    %c0_28 = arith.constant 0 : index
    %c0_29 = arith.constant 0 : index
    %38 = vector.load %arg11[%c0_28, %c0_29] : memref<2x128xf32, #tpu.memory_space<vmem>>, vector<2x128xf32>
    tpu.vector_store %arg11[%c0_28, %c0_29], %37 {strides = array<i32>} : memref<2x128xf32, #tpu.memory_space<vmem>>, vector<2x128xf32>,
    return
  }
}

</mosaic_0001>

<llo_original>
// kernel: critic_forward.1
$region0: #{critic_forward.1}
  #allocation0 [shape = 'u32[]', space=smem, size = 0x4, offset = 0x4, fixed_abs, tag = 'smem constant byte address 0x4 - core index']
  #allocation1 [shape = 'u32[144,128]{1,0:T(1,128)}', space=vmem, size = 0x12000, scoped, tag = 'internal scratch']
  %s0 = inlined_call_operand.vmem [shape: f32[2,1024], index: 0, kind: input, shape index: {}]
  %s1 = inlined_call_operand.hbm [shape: bf16[1024,512], index: 1, kind: input, shape index: {}]
  %s2 = inlined_call_operand.vmem [shape: f32[1,512], index: 2, kind: input, shape index: {}]
  %s3 = inlined_call_operand.hbm [shape: bf16[512,256], index: 3, kind: input, shape index: {}]
  %s4 = inlined_call_operand.vmem [shape: f32[1,256], index: 4, kind: input, shape index: {}]
  %s5 = inlined_call_operand.vmem [shape: bf16[256,128], index: 5, kind: input, shape index: {}]
  %s6 = inlined_call_operand.vmem [shape: f32[1,128], index: 6, kind: input, shape index: {}]
  %s7 = inlined_call_operand.hbm [shape: bf16[128,128], index: 7, kind: input, shape index: {}]
  %s8 = inlined_call_operand.vmem [shape: f32[1,128], index: 8, kind: input, shape index: {}]
  %s9 = inlined_call_operand.hbm [shape: bf16[128,128], index: 9, kind: input, shape index: {}]
  %s10 = inlined_call_operand.vmem [shape: f32[1,128], index: 10, kind: input, shape index: {}]
  %s11 = inlined_call_operand.vmem [shape: f32[2,128], index: 11, kind: output, shape index: {}]
  %s12 = sld [smem:[#allocation0]]
  $region70: #{critic_forward.1} parent=0
    _
  %s14 = ssub.s32 1, %s12
  %s15 = scalar_select 0, %s14, %s12
  $region1: #{critic_forward.1} parent=0
    #allocation2 [shape = 'u8[1048576]{0}', space=vmem, size = 0x100000, scoped, tag = 'input window, operand 1, single buffered']
    #allocation3 [shape = 's32[1]{0}', space=sflag, size = 0x4, scoped, tag = 'scoped memory for critic_forward.1']
    #allocation4 [shape = 'u8[262144]{0}', space=vmem, size = 0x40000, scoped, tag = 'input window, operand 3, single buffered']
    #allocation5 [shape = 's32[1]{0}', space=sflag, size = 0x4, scoped, tag = 'scoped memory for critic_forward.1']
    #allocation6 [shape = 'u8[32768]{0}', space=vmem, size = 0x8000, scoped, tag = 'input window, operand 7, single buffered']
    #allocation7 [shape = 'u8[32768]{0}', space=vmem, size = 0x8000, scoped, tag = 'input window, operand 9, single buffered']
    #allocation8 [shape = 's32[1]{0}', space=sflag, size = 0x4, scoped, tag = 'scoped memory for critic_forward.1']
    %16 = vsyncpa [#allocation3], 0
    %17 = vsyncpa [#allocation5], 0
    %18 = vsyncpa [#allocation8], 0
    // Predicated region
    $region2: #{critic_forward.1} parent=1 // pred_check
      _
    $region3: #{critic_forward.1} parent=1 // pred_check_branch
      %20 = sbr.rel (0) target = $region5
    $region4: #{critic_forward.1} parent=1 // pred_region
      _
    $region5: #{critic_forward.1} parent=1 // pred_fallthru
      _
    // Predicated region
    $region6: #{critic_forward.1} parent=1 // pred_check
      _
    $region7: #{critic_forward.1} parent=1 // pred_check_branch
      %22 = sbr.rel (0) target = $region9
    $region8: #{critic_forward.1} parent=1 // pred_region
      %s24 = ssub.s32 32768, 32768
      %25 = vsyncadd [#allocation3], %s24
      %s26 = sshll.u32 [#allocation2], 4
      %s27 = int_to_ptr.vmem [resolvable:$true] %s26
      %32 = dma.hbm_to_vmem [thread:$0]  %s1, 32768, %s27, [#allocation3], 256, 256, 16
    $region9: #{critic_forward.1} parent=1 // pred_fallthru
      _
    // Predicated region
    $region10: #{critic_forward.1} parent=1 // pred_check
      _
    $region11: #{critic_forward.1} parent=1 // pred_check_branch
      %34 = sbr.rel (0) target = $region13
    $region12: #{critic_forward.1} parent=1 // pred_region
      _
    $region13: #{critic_forward.1} parent=1 // pred_fallthru
      _
    // Predicated region
    $region14: #{critic_forward.1} parent=1 // pred_check
      _
    $region15: #{critic_forward.1} parent=1 // pred_check_branch
      %36 = sbr.rel (0) target = $region17
    $region16: #{critic_forward.1} parent=1 // pred_region
      %s38 = ssub.s32 8192, 8192
      %39 = vsyncadd [#allocation5], %s38
      %s40 = sshll.u32 [#allocation4], 4
      %s41 = int_to_ptr.vmem [resolvable:$true] %s40
      %46 = dma.hbm_to_vmem [thread:$0]  %s3, 8192, %s41, [#allocation5], 128, 128, 8
    $region17: #{critic_forward.1} parent=1 // pred_fallthru
      _
    // Predicated region
    $region18: #{critic_forward.1} parent=1 // pred_check
      _
    $region19: #{critic_forward.1} parent=1 // pred_check_branch
      %48 = sbr.rel (0) target = $region21
    $region20: #{critic_forward.1} parent=1 // pred_region
      _
    $region21: #{critic_forward.1} parent=1 // pred_fallthru
      _
    // Predicated region
    $region22: #{critic_forward.1} parent=1 // pred_check
      _
    $region23: #{critic_forward.1} parent=1 // pred_check_branch
      %50 = sbr.rel (0) target = $region25
    $region24: #{critic_forward.1} parent=1 // pred_region
      _
    $region25: #{critic_forward.1} parent=1 // pred_fallthru
      _
    // Predicated region
    $region26: #{critic_forward.1} parent=1 // pred_check
      _
    $region27: #{critic_forward.1} parent=1 // pred_check_branch
      %52 = sbr.rel (0) target = $region29
    $region28: #{critic_forward.1} parent=1 // pred_region
      _
    $region29: #{critic_forward.1} parent=1 // pred_fallthru
      _
    // Predicated region
    $region30: #{critic_forward.1} parent=1 // pred_check
      _
    $region31: #{critic_forward.1} parent=1 // pred_check_branch
      %54 = sbr.rel (0) target = $region33
    $region32: #{critic_forward.1} parent=1 // pred_region
      %s56 = ssub.s32 1024, 1024
      %57 = vsyncadd [#allocation5], %s56
      %s58 = sshll.u32 [#allocation6], 4
      %s59 = int_to_ptr.vmem [resolvable:$true] %s58
      %64 = dma.hbm_to_vmem [thread:$0]  %s7, 1024, %s59, [#allocation5], 64, 64, 4
    $region33: #{critic_forward.1} parent=1 // pred_fallthru
      _
    // Predicated region
    $region34: #{critic_forward.1} parent=1 // pred_check
      _
    $region35: #{critic_forward.1} parent=1 // pred_check_branch
      %66 = sbr.rel (0) target = $region37
    $region36: #{critic_forward.1} parent=1 // pred_region
      _
    $region37: #{critic_forward.1} parent=1 // pred_fallthru
      _
    // Predicated region
    $region38: #{critic_forward.1} parent=1 // pred_check
      _
    $region39: #{critic_forward.1} parent=1 // pred_check_branch
      %68 = sbr.rel (0) target = $region41
    $region40: #{critic_forward.1} parent=1 // pred_region
      %s70 = ssub.s32 1024, 1024
      %71 = vsyncadd [#allocation8], %s70
      %s72 = sshll.u32 [#allocation7], 4
      %s73 = int_to_ptr.vmem [resolvable:$true] %s72
      %78 = dma.hbm_to_vmem [thread:$0]  %s9, 1024, %s73, [#allocation8], 64, 64, 4
    $region41: #{critic_forward.1} parent=1 // pred_fallthru
      _
    // Predicated region
    $region42: #{critic_forward.1} parent=1 // pred_check
      _
    $region43: #{critic_forward.1} parent=1 // pred_check_branch
      %80 = sbr.rel (0) target = $region45
    $region44: #{critic_forward.1} parent=1 // pred_region
      _
    $region45: #{critic_forward.1} parent=1 // pred_fallthru
      _
    // Predicated region
    $region46: #{critic_forward.1} parent=1 // pred_check
      _
    $region47: #{critic_forward.1} parent=1 // pred_check_branch
      %82 = sbr.rel (0) target = $region49
    $region48: #{critic_forward.1} parent=1 // pred_region
      %83 = dma.done [#allocation3], 32768
    $region49: #{critic_forward.1} parent=1 // pred_fallthru
      _
    // Predicated region
    $region50: #{critic_forward.1} parent=1 // pred_check
      _
    $region51: #{critic_forward.1} parent=1 // pred_check_branch
      %85 = sbr.rel (0) target = $region53
    $region52: #{critic_forward.1} parent=1 // pred_region
      %86 = dma.done [#allocation5], 8192
    $region53: #{critic_forward.1} parent=1 // pred_fallthru
      _
    // Predicated region
    $region54: #{critic_forward.1} parent=1 // pred_check
      _
    $region55: #{critic_forward.1} parent=1 // pred_check_branch
      %88 = sbr.rel (0) target = $region57
    $region56: #{critic_forward.1} parent=1 // pred_region
      %89 = dma.done [#allocation5], 1024
    $region57: #{critic_forward.1} parent=1 // pred_fallthru
      _
    // Predicated region
    $region58: #{critic_forward.1} parent=1 // pred_check
      _
    $region59: #{critic_forward.1} parent=1 // pred_check_branch
      %91 = sbr.rel (0) target = $region61
    $region60: #{critic_forward.1} parent=1 // pred_region
      %92 = dma.done [#allocation8], 1024
    $region61: #{critic_forward.1} parent=1 // pred_fallthru
      _
    %v94 = vld [vmem:[%s0] sm:$0xff]
    %v95 = vld [vmem:[%s0 + $0x8] sm:$0xff]
    %v98 = vcombine.high %v94, %v94
    %v100 = vunpack.c.l.s4 1983009808
    %v101 = vunpack.c.0.s8 %v100
    %v102 = vlaneseq
    %v103 = vshrl.u32 %v102, 7
    %v104 = vsub.s32 %v101, %v103
    %v105 = vrot.slane %v94, %v104
    %v107 = vunpack.c.l.s4 1983009808
    %v108 = vunpack.c.0.s8 %v107
    %v109 = vlaneseq
    %v110 = vshrl.u32 %v109, 7
    %v111 = vsub.s32 %v108, %v110
    %v112 = vrot.slane %v98, %v111
    %v113 = vcombine.high %v105, %v105
    %v114 = vcombine.high %v112, %v112
    %v115 = vcombine.high %v95, %v95
    %v117 = vunpack.c.l.s4 1983009808
    %v118 = vunpack.c.0.s8 %v117
    %v119 = vlaneseq
    %v120 = vshrl.u32 %v119, 7
    %v121 = vsub.s32 %v118, %v120
    %v122 = vrot.slane %v95, %v121
    %v124 = vunpack.c.l.s4 1983009808
    %v125 = vunpack.c.0.s8 %v124
    %v126 = vlaneseq
    %v127 = vshrl.u32 %v126, 7
    %v128 = vsub.s32 %v125, %v127
    %v129 = vrot.slane %v115, %v128
    %v130 = vcombine.high %v122, %v122
    %v131 = vcombine.high %v129, %v129
    %v140 = vpack.c.bf16 %v105, %v105
    %v141 = vpack.c.bf16 %v113, %v113
    %v142 = vpack.c.bf16 %v112, %v112
    %v143 = vpack.c.bf16 %v114, %v114
    %v144 = vpack.c.bf16 %v122, %v122
    %v145 = vpack.c.bf16 %v130, %v130
    %v146 = vpack.c.bf16 %v129, %v129
    %v147 = vpack.c.bf16 %v131, %v131
    %v148 = vld [vmem:[#allocation2] sm:$0xff]
    %v149 = vld [vmem:[#allocation2 + $0x8] sm:$0xff]
    %v150 = vld [vmem:[#allocation2 + $0x10] sm:$0xff]
    %v151 = vld [vmem:[#allocation2 + $0x18] sm:$0xff]
    %v152 = vld [vmem:[#allocation2 + $0x20] sm:$0xff]
    %v153 = vld [vmem:[#allocation2 + $0x28] sm:$0xff]
    %v154 = vld [vmem:[#allocation2 + $0x30] sm:$0xff]
    %v155 = vld [vmem:[#allocation2 + $0x38] sm:$0xff]
    %v156 = vld [vmem:[#allocation2 + $0x40] sm:$0xff]
    %v157 = vld [vmem:[#allocation2 + $0x48] sm:$0xff]
    %v158 = vld [vmem:[#allocation2 + $0x50] sm:$0xff]
    %v159 = vld [vmem:[#allocation2 + $0x58] sm:$0xff]
    %v160 = vld [vmem:[#allocation2 + $0x60] sm:$0xff]
    %v161 = vld [vmem:[#allocation2 + $0x68] sm:$0xff]
    %v162 = vld [vmem:[#allocation2 + $0x70] sm:$0xff]
    %v163 = vld [vmem:[#allocation2 + $0x78] sm:$0xff]
    %v164 = vld [vmem:[#allocation2 + $0x80] sm:$0xff]
    %v165 = vld [vmem:[#allocation2 + $0x88] sm:$0xff]
    %v166 = vld [vmem:[#allocation2 + $0x90] sm:$0xff]
    %v167 = vld [vmem:[#allocation2 + $0x98] sm:$0xff]
    %v168 = vld [vmem:[#allocation2 + $0xa0] sm:$0xff]
    %v169 = vld [vmem:[#allocation2 + $0xa8] sm:$0xff]
    %v170 = vld [vmem:[#allocation2 + $0xb0] sm:$0xff]
    %v171 = vld [vmem:[#allocation2 + $0xb8] sm:$0xff]
    %v172 = vld [vmem:[#allocation2 + $0xc0] sm:$0xff]
    %v173 = vld [vmem:[#allocation2 + $0xc8] sm:$0xff]
    %v174 = vld [vmem:[#allocation2 + $0xd0] sm:$0xff]
    %v175 = vld [vmem:[#allocation2 + $0xd8] sm:$0xff]
    %v176 = vld [vmem:[#allocation2 + $0xe0] sm:$0xff]
    %v177 = vld [vmem:[#allocation2 + $0xe8] sm:$0xff]
    %v178 = vld [vmem:[#allocation2 + $0xf0] sm:$0xff]
    %v179 = vld [vmem:[#allocation2 + $0xf8] sm:$0xff]
    %v180 = vld [vmem:[#allocation2 + $0x100] sm:$0xff]
    %v181 = vld [vmem:[#allocation2 + $0x108] sm:$0xff]
    %v182 = vld [vmem:[#allocation2 + $0x110] sm:$0xff]
    %v183 = vld [vmem:[#allocation2 + $0x118] sm:$0xff]
    %v184 = vld [vmem:[#allocation2 + $0x120] sm:$0xff]
    %v185 = vld [vmem:[#allocation2 + $0x128] sm:$0xff]
    %v186 = vld [vmem:[#allocation2 + $0x130] sm:$0xff]
    %v187 = vld [vmem:[#allocation2 + $0x138] sm:$0xff]
    %v188 = vld [vmem:[#allocation2 + $0x140] sm:$0xff]
    %v189 = vld [vmem:[#allocation2 + $0x148] sm:$0xff]
    %v190 = vld [vmem:[#allocation2 + $0x150] sm:$0xff]
    %v191 = vld [vmem:[#allocation2 + $0x158] sm:$0xff]
    %v192 = vld [vmem:[#allocation2 + $0x160] sm:$0xff]
    %v193 = vld [vmem:[#allocation2 + $0x168] sm:$0xff]
    %v194 = vld [vmem:[#allocation2 + $0x170] sm:$0xff]
    %v195 = vld [vmem:[#allocation2 + $0x178] sm:$0xff]
    %v196 = vld [vmem:[#allocation2 + $0x180] sm:$0xff]
    %v197 = vld [vmem:[#allocation2 + $0x188] sm:$0xff]
    %v198 = vld [vmem:[#allocation2 + $0x190] sm:$0xff]
    %v199 = vld [vmem:[#allocation2 + $0x198] sm:$0xff]
    %v200 = vld [vmem:[#allocation2 + $0x1a0] sm:$0xff]
    %v201 = vld [vmem:[#allocation2 + $0x1a8] sm:$0xff]
    %v202 = vld [vmem:[#allocation2 + $0x1b0] sm:$0xff]
    %v203 = vld [vmem:[#allocation2 + $0x1b8] sm:$0xff]
    %v204 = vld [vmem:[#allocation2 + $0x1c0] sm:$0xff]
    %v205 = vld [vmem:[#allocation2 + $0x1c8] sm:$0xff]
    %v206 = vld [vmem:[#allocation2 + $0x1d0] sm:$0xff]
    %v207 = vld [vmem:[#allocation2 + $0x1d8] sm:$0xff]
    %v208 = vld [vmem:[#allocation2 + $0x1e0] sm:$0xff]
    %v209 = vld [vmem:[#allocation2 + $0x1e8] sm:$0xff]
    %v210 = vld [vmem:[#allocation2 + $0x1f0] sm:$0xff]
    %v211 = vld [vmem:[#allocation2 + $0x1f8] sm:$0xff]
    %v212 = vld [vmem:[#allocation2 + $0x200] sm:$0xff]
    %v213 = vld [vmem:[#allocation2 + $0x208] sm:$0xff]
    %v214 = vld [vmem:[#allocation2 + $0x210] sm:$0xff]
    %v215 = vld [vmem:[#allocation2 + $0x218] sm:$0xff]
    %v216 = vld [vmem:[#allocation2 + $0x220] sm:$0xff]
    %v217 = vld [vmem:[#allocation2 + $0x228] sm:$0xff]
    %v218 = vld [vmem:[#allocation2 + $0x230] sm:$0xff]
    %v219 = vld [vmem:[#allocation2 + $0x238] sm:$0xff]
    %v220 = vld [vmem:[#allocation2 + $0x240] sm:$0xff]
    %v221 = vld [vmem:[#allocation2 + $0x248] sm:$0xff]
    %v222 = vld [vmem:[#allocation2 + $0x250] sm:$0xff]
    %v223 = vld [vmem:[#allocation2 + $0x258] sm:$0xff]
    %v224 = vld [vmem:[#allocation2 + $0x260] sm:$0xff]
    %v225 = vld [vmem:[#allocation2 + $0x268] sm:$0xff]
    %v226 = vld [vmem:[#allocation2 + $0x270] sm:$0xff]
    %v227 = vld [vmem:[#allocation2 + $0x278] sm:$0xff]
    %v228 = vld [vmem:[#allocation2 + $0x280] sm:$0xff]
    %v229 = vld [vmem:[#allocation2 + $0x288] sm:$0xff]
    %v230 = vld [vmem:[#allocation2 + $0x290] sm:$0xff]
    %v231 = vld [vmem:[#allocation2 + $0x298] sm:$0xff]
    %v232 = vld [vmem:[#allocation2 + $0x2a0] sm:$0xff]
    %v233 = vld [vmem:[#allocation2 + $0x2a8] sm:$0xff]
    %v234 = vld [vmem:[#allocation2 + $0x2b0] sm:$0xff]
    %v235 = vld [vmem:[#allocation2 + $0x2b8] sm:$0xff]
    %v236 = vld [vmem:[#allocation2 + $0x2c0] sm:$0xff]
    %v237 = vld [vmem:[#allocation2 + $0x2c8] sm:$0xff]
    %v238 = vld [vmem:[#allocation2 + $0x2d0] sm:$0xff]
    %v239 = vld [vmem:[#allocation2 + $0x2d8] sm:$0xff]
    %v240 = vld [vmem:[#allocation2 + $0x2e0] sm:$0xff]
    %v241 = vld [vmem:[#allocation2 + $0x2e8] sm:$0xff]
    %v242 = vld [vmem:[#allocation2 + $0x2f0] sm:$0xff]
    %v243 = vld [vmem:[#allocation2 + $0x2f8] sm:$0xff]
    %v244 = vld [vmem:[#allocation2 + $0x300] sm:$0xff]
    %v245 = vld [vmem:[#allocation2 + $0x308] sm:$0xff]
    %v246 = vld [vmem:[#allocation2 + $0x310] sm:$0xff]
    %v247 = vld [vmem:[#allocation2 + $0x318] sm:$0xff]
    %v248 = vld [vmem:[#allocation2 + $0x320] sm:$0xff]
    %v249 = vld [vmem:[#allocation2 + $0x328] sm:$0xff]
    %v250 = vld [vmem:[#allocation2 + $0x330] sm:$0xff]
    %v251 = vld [vmem:[#allocation2 + $0x338] sm:$0xff]
    %v252 = vld [vmem:[#allocation2 + $0x340] sm:$0xff]
    %v253 = vld [vmem:[#allocation2 + $0x348] sm:$0xff]
    %v254 = vld [vmem:[#allocation2 + $0x350] sm:$0xff]
    %v255 = vld [vmem:[#allocation2 + $0x358] sm:$0xff]
    %v256 = vld [vmem:[#allocation2 + $0x360] sm:$0xff]
    %v257 = vld [vmem:[#allocation2 + $0x368] sm:$0xff]
    %v258 = vld [vmem:[#allocation2 + $0x370] sm:$0xff]
    %v259 = vld [vmem:[#allocation2 + $0x378] sm:$0xff]
    %v260 = vld [vmem:[#allocation2 + $0x380] sm:$0xff]
    %v261 = vld [vmem:[#allocation2 + $0x388] sm:$0xff]
    %v262 = vld [vmem:[#allocation2 + $0x390] sm:$0xff]
    %v263 = vld [vmem:[#allocation2 + $0x398] sm:$0xff]
    %v264 = vld [vmem:[#allocation2 + $0x3a0] sm:$0xff]
    %v265 = vld [vmem:[#allocation2 + $0x3a8] sm:$0xff]
    %v266 = vld [vmem:[#allocation2 + $0x3b0] sm:$0xff]
    %v267 = vld [vmem:[#allocation2 + $0x3b8] sm:$0xff]
    %v268 = vld [vmem:[#allocation2 + $0x3c0] sm:$0xff]
    %v269 = vld [vmem:[#allocation2 + $0x3c8] sm:$0xff]
    %v270 = vld [vmem:[#allocation2 + $0x3d0] sm:$0xff]
    %v271 = vld [vmem:[#allocation2 + $0x3d8] sm:$0xff]
    %v272 = vld [vmem:[#allocation2 + $0x3e0] sm:$0xff]
    %v273 = vld [vmem:[#allocation2 + $0x3e8] sm:$0xff]
    %v274 = vld [vmem:[#allocation2 + $0x3f0] sm:$0xff]
    %v275 = vld [vmem:[#allocation2 + $0x3f8] sm:$0xff]
    %v276 = vld [vmem:[#allocation2 + $0x400] sm:$0xff]
    %v277 = vld [vmem:[#allocation2 + $0x408] sm:$0xff]
    %v278 = vld [vmem:[#allocation2 + $0x410] sm:$0xff]
    %v279 = vld [vmem:[#allocation2 + $0x418] sm:$0xff]
    %v280 = vld [vmem:[#allocation2 + $0x420] sm:$0xff]
    %v281 = vld [vmem:[#allocation2 + $0x428] sm:$0xff]
    %v282 = vld [vmem:[#allocation2 + $0x430] sm:$0xff]
    %v283 = vld [vmem:[#allocation2 + $0x438] sm:$0xff]
    %v284 = vld [vmem:[#allocation2 + $0x440] sm:$0xff]
    %v285 = vld [vmem:[#allocation2 + $0x448] sm:$0xff]
    %v286 = vld [vmem:[#allocation2 + $0x450] sm:$0xff]
    %v287 = vld [vmem:[#allocation2 + $0x458] sm:$0xff]
    %v288 = vld [vmem:[#allocation2 + $0x460] sm:$0xff]
    %v289 = vld [vmem:[#allocation2 + $0x468] sm:$0xff]
    %v290 = vld [vmem:[#allocation2 + $0x470] sm:$0xff]
    %v291 = vld [vmem:[#allocation2 + $0x478] sm:$0xff]
    %v292 = vld [vmem:[#allocation2 + $0x480] sm:$0xff]
    %v293 = vld [vmem:[#allocation2 + $0x488] sm:$0xff]
    %v294 = vld [vmem:[#allocation2 + $0x490] sm:$0xff]
    %v295 = vld [vmem:[#allocation2 + $0x498] sm:$0xff]
    %v296 = vld [vmem:[#allocation2 + $0x4a0] sm:$0xff]
    %v297 = vld [vmem:[#allocation2 + $0x4a8] sm:$0xff]
    %v298 = vld [vmem:[#allocation2 + $0x4b0] sm:$0xff]
    %v299 = vld [vmem:[#allocation2 + $0x4b8] sm:$0xff]
    %v300 = vld [vmem:[#allocation2 + $0x4c0] sm:$0xff]
    %v301 = vld [vmem:[#allocation2 + $0x4c8] sm:$0xff]
    %v302 = vld [vmem:[#allocation2 + $0x4d0] sm:$0xff]
    %v303 = vld [vmem:[#allocation2 + $0x4d8] sm:$0xff]
    %v304 = vld [vmem:[#allocation2 + $0x4e0] sm:$0xff]
    %v305 = vld [vmem:[#allocation2 + $0x4e8] sm:$0xff]
    %v306 = vld [vmem:[#allocation2 + $0x4f0] sm:$0xff]
    %v307 = vld [vmem:[#allocation2 + $0x4f8] sm:$0xff]
    %v308 = vld [vmem:[#allocation2 + $0x500] sm:$0xff]
    %v309 = vld [vmem:[#allocation2 + $0x508] sm:$0xff]
    %v310 = vld [vmem:[#allocation2 + $0x510] sm:$0xff]
    %v311 = vld [vmem:[#allocation2 + $0x518] sm:$0xff]
    %v312 = vld [vmem:[#allocation2 + $0x520] sm:$0xff]
    %v313 = vld [vmem:[#allocation2 + $0x528] sm:$0xff]
    %v314 = vld [vmem:[#allocation2 + $0x530] sm:$0xff]
    %v315 = vld [vmem:[#allocation2 + $0x538] sm:$0xff]
    %v316 = vld [vmem:[#allocation2 + $0x540] sm:$0xff]
    %v317 = vld [vmem:[#allocation2 + $0x548] sm:$0xff]
    %v318 = vld [vmem:[#allocation2 + $0x550] sm:$0xff]
    %v319 = vld [vmem:[#allocation2 + $0x558] sm:$0xff]
    %v320 = vld [vmem:[#allocation2 + $0x560] sm:$0xff]
    %v321 = vld [vmem:[#allocation2 + $0x568] sm:$0xff]
    %v322 = vld [vmem:[#allocation2 + $0x570] sm:$0xff]
    %v323 = vld [vmem:[#allocation2 + $0x578] sm:$0xff]
    %v324 = vld [vmem:[#allocation2 + $0x580] sm:$0xff]
    %v325 = vld [vmem:[#allocation2 + $0x588] sm:$0xff]
    %v326 = vld [vmem:[#allocation2 + $0x590] sm:$0xff]
    %v327 = vld [vmem:[#allocation2 + $0x598] sm:$0xff]
    %v328 = vld [vmem:[#allocation2 + $0x5a0] sm:$0xff]
    %v329 = vld [vmem:[#allocation2 + $0x5a8] sm:$0xff]
    %v330 = vld [vmem:[#allocation2 + $0x5b0] sm:$0xff]
    %v331 = vld [vmem:[#allocation2 + $0x5b8] sm:$0xff]
    %v332 = vld [vmem:[#allocation2 + $0x5c0] sm:$0xff]
    %v333 = vld [vmem:[#allocation2 + $0x5c8] sm:$0xff]
    %v334 = vld [vmem:[#allocation2 + $0x5d0] sm:$0xff]
    %v335 = vld [vmem:[#allocation2 + $0x5d8] sm:$0xff]
    %v336 = vld [vmem:[#allocation2 + $0x5e0] sm:$0xff]
    %v337 = vld [vmem:[#allocation2 + $0x5e8] sm:$0xff]
    %v338 = vld [vmem:[#allocation2 + $0x5f0] sm:$0xff]
    %v339 = vld [vmem:[#allocation2 + $0x5f8] sm:$0xff]
    %v340 = vld [vmem:[#allocation2 + $0x600] sm:$0xff]
    %v341 = vld [vmem:[#allocation2 + $0x608] sm:$0xff]
    %v342 = vld [vmem:[#allocation2 + $0x610] sm:$0xff]
    %v343 = vld [vmem:[#allocation2 + $0x618] sm:$0xff]
    %v344 = vld [vmem:[#allocation2 + $0x620] sm:$0xff]
    %v345 = vld [vmem:[#allocation2 + $0x628] sm:$0xff]
    %v346 = vld [vmem:[#allocation2 + $0x630] sm:$0xff]
    %v347 = vld [vmem:[#allocation2 + $0x638] sm:$0xff]
    %v348 = vld [vmem:[#allocation2 + $0x640] sm:$0xff]
    %v349 = vld [vmem:[#allocation2 + $0x648] sm:$0xff]
    %v350 = vld [vmem:[#allocation2 + $0x650] sm:$0xff]
    %v351 = vld [vmem:[#allocation2 + $0x658] sm:$0xff]
    %v352 = vld [vmem:[#allocation2 + $0x660] sm:$0xff]
    %v353 = vld [vmem:[#allocation2 + $0x668] sm:$0xff]
    %v354 = vld [vmem:[#allocation2 + $0x670] sm:$0xff]
    %v355 = vld [vmem:[#allocation2 + $0x678] sm:$0xff]
    %v356 = vld [vmem:[#allocation2 + $0x680] sm:$0xff]
    %v357 = vld [vmem:[#allocation2 + $0x688] sm:$0xff]
    %v358 = vld [vmem:[#allocation2 + $0x690] sm:$0xff]
    %v359 = vld [vmem:[#allocation2 + $0x698] sm:$0xff]
    %v360 = vld [vmem:[#allocation2 + $0x6a0] sm:$0xff]
    %v361 = vld [vmem:[#allocation2 + $0x6a8] sm:$0xff]
    %v362 = vld [vmem:[#allocation2 + $0x6b0] sm:$0xff]
    %v363 = vld [vmem:[#allocation2 + $0x6b8] sm:$0xff]
    %v364 = vld [vmem:[#allocation2 + $0x6c0] sm:$0xff]
    %v365 = vld [vmem:[#allocation2 + $0x6c8] sm:$0xff]
    %v366 = vld [vmem:[#allocation2 + $0x6d0] sm:$0xff]
    %v367 = vld [vmem:[#allocation2 + $0x6d8] sm:$0xff]
    %v368 = vld [vmem:[#allocation2 + $0x6e0] sm:$0xff]
    %v369 = vld [vmem:[#allocation2 + $0x6e8] sm:$0xff]
    %v370 = vld [vmem:[#allocation2 + $0x6f0] sm:$0xff]
    %v371 = vld [vmem:[#allocation2 + $0x6f8] sm:$0xff]
    %v372 = vld [vmem:[#allocation2 + $0x700] sm:$0xff]
    %v373 = vld [vmem:[#allocation2 + $0x708] sm:$0xff]
    %v374 = vld [vmem:[#allocation2 + $0x710] sm:$0xff]
    %v375 = vld [vmem:[#allocation2 + $0x718] sm:$0xff]
    %v376 = vld [vmem:[#allocation2 + $0x720] sm:$0xff]
    %v377 = vld [vmem:[#allocation2 + $0x728] sm:$0xff]
    %v378 = vld [vmem:[#allocation2 + $0x730] sm:$0xff]
    %v379 = vld [vmem:[#allocation2 + $0x738] sm:$0xff]
    %v380 = vld [vmem:[#allocation2 + $0x740] sm:$0xff]
    %v381 = vld [vmem:[#allocation2 + $0x748] sm:$0xff]
    %v382 = vld [vmem:[#allocation2 + $0x750] sm:$0xff]
    %v383 = vld [vmem:[#allocation2 + $0x758] sm:$0xff]
    %v384 = vld [vmem:[#allocation2 + $0x760] sm:$0xff]
    %v385 = vld [vmem:[#allocation2 + $0x768] sm:$0xff]
    %v386 = vld [vmem:[#allocation2 + $0x770] sm:$0xff]
    %v387 = vld [vmem:[#allocation2 + $0x778] sm:$0xff]
    %v388 = vld [vmem:[#allocation2 + $0x780] sm:$0xff]
    %v389 = vld [vmem:[#allocation2 + $0x788] sm:$0xff]
    %v390 = vld [vmem:[#allocation2 + $0x790] sm:$0xff]
    %v391 = vld [vmem:[#allocation2 + $0x798] sm:$0xff]
    %v392 = vld [vmem:[#allocation2 + $0x7a0] sm:$0xff]
    %v393 = vld [vmem:[#allocation2 + $0x7a8] sm:$0xff]
    %v394 = vld [vmem:[#allocation2 + $0x7b0] sm:$0xff]
    %v395 = vld [vmem:[#allocation2 + $0x7b8] sm:$0xff]
    %v396 = vld [vmem:[#allocation2 + $0x7c0] sm:$0xff]
    %v397 = vld [vmem:[#allocation2 + $0x7c8] sm:$0xff]
    %v398 = vld [vmem:[#allocation2 + $0x7d0] sm:$0xff]
    %v399 = vld [vmem:[#allocation2 + $0x7d8] sm:$0xff]
    %v400 = vld [vmem:[#allocation2 + $0x7e0] sm:$0xff]
    %v401 = vld [vmem:[#allocation2 + $0x7e8] sm:$0xff]
    %v402 = vld [vmem:[#allocation2 + $0x7f0] sm:$0xff]
    %v403 = vld [vmem:[#allocation2 + $0x7f8] sm:$0xff]
    %v404 = vld [vmem:[%s2] sm:$0xf]
    %v406 = vlaneseq
    %v407 = vshrl.u32 %v406, 7
    %v408 = vsub.s32 0, %v407
    %v409 = vrot.slane %v404, %v408
    %v410 = vlaneseq
    %v411 = vshrl.u32 %v410, 7
    %v412 = vsub.s32 1, %v411
    %v413 = vrot.slane %v404, %v412
    %v414 = vlaneseq
    %v415 = vshrl.u32 %v414, 7
    %v416 = vsub.s32 2, %v415
    %v417 = vrot.slane %v404, %v416
    %v418 = vlaneseq
    %v419 = vshrl.u32 %v418, 7
    %v420 = vsub.s32 3, %v419
    %v421 = vrot.slane %v404, %v420
    %v682 = vunpack.c.l.b16 %v148
    %v683 = vunpack.c.h.b16 %v148
    %v684 = vunpack.c.l.b16 %v149
    %v685 = vunpack.c.h.b16 %v149
    %v686 = vunpack.c.l.b16 %v150
    %v687 = vunpack.c.h.b16 %v150
    %v688 = vunpack.c.l.b16 %v151
    %v689 = vunpack.c.h.b16 %v151
    %v690 = vunpack.c.l.b16 %v152
    %v691 = vunpack.c.h.b16 %v152
    %v692 = vunpack.c.l.b16 %v153
    %v693 = vunpack.c.h.b16 %v153
    %v694 = vunpack.c.l.b16 %v154
    %v695 = vunpack.c.h.b16 %v154
    %v696 = vunpack.c.l.b16 %v155
    %v697 = vunpack.c.h.b16 %v155
    %v698 = vunpack.c.l.b16 %v156
    %v699 = vunpack.c.h.b16 %v156
    %v700 = vunpack.c.l.b16 %v157
    %v701 = vunpack.c.h.b16 %v157
    %v702 = vunpack.c.l.b16 %v158
    %v703 = vunpack.c.h.b16 %v158
    %v704 = vunpack.c.l.b16 %v159
    %v705 = vunpack.c.h.b16 %v159
    %v706 = vunpack.c.l.b16 %v160
    %v707 = vunpack.c.h.b16 %v160
    %v708 = vunpack.c.l.b16 %v161
    %v709 = vunpack.c.h.b16 %v161
    %v710 = vunpack.c.l.b16 %v162
    %v711 = vunpack.c.h.b16 %v162
    %v712 = vunpack.c.l.b16 %v163
    %v713 = vunpack.c.h.b16 %v163
    %v714 = vunpack.c.l.b16 %v164
    %v715 = vunpack.c.h.b16 %v164
    %v716 = vunpack.c.l.b16 %v165
    %v717 = vunpack.c.h.b16 %v165
    %v718 = vunpack.c.l.b16 %v166
    %v719 = vunpack.c.h.b16 %v166
    %v720 = vunpack.c.l.b16 %v167
    %v721 = vunpack.c.h.b16 %v167
    %v722 = vunpack.c.l.b16 %v168
    %v723 = vunpack.c.h.b16 %v168
    %v724 = vunpack.c.l.b16 %v169
    %v725 = vunpack.c.h.b16 %v169
    %v726 = vunpack.c.l.b16 %v170
    %v727 = vunpack.c.h.b16 %v170
    %v728 = vunpack.c.l.b16 %v171
    %v729 = vunpack.c.h.b16 %v171
    %v730 = vunpack.c.l.b16 %v172
    %v731 = vunpack.c.h.b16 %v172
    %v732 = vunpack.c.l.b16 %v173
    %v733 = vunpack.c.h.b16 %v173
    %v734 = vunpack.c.l.b16 %v174
    %v735 = vunpack.c.h.b16 %v174
    %v736 = vunpack.c.l.b16 %v175
    %v737 = vunpack.c.h.b16 %v175
    %v738 = vunpack.c.l.b16 %v176
    %v739 = vunpack.c.h.b16 %v176
    %v740 = vunpack.c.l.b16 %v177
    %v741 = vunpack.c.h.b16 %v177
    %v742 = vunpack.c.l.b16 %v178
    %v743 = vunpack.c.h.b16 %v178
    %v744 = vunpack.c.l.b16 %v179
    %v745 = vunpack.c.h.b16 %v179
    %v746 = vunpack.c.l.b16 %v180
    %v747 = vunpack.c.h.b16 %v180
    %v748 = vunpack.c.l.b16 %v181
    %v749 = vunpack.c.h.b16 %v181
    %v750 = vunpack.c.l.b16 %v182
    %v751 = vunpack.c.h.b16 %v182
    %v752 = vunpack.c.l.b16 %v183
    %v753 = vunpack.c.h.b16 %v183
    %v754 = vunpack.c.l.b16 %v184
    %v755 = vunpack.c.h.b16 %v184
    %v756 = vunpack.c.l.b16 %v185
    %v757 = vunpack.c.h.b16 %v185
    %v758 = vunpack.c.l.b16 %v186
    %v759 = vunpack.c.h.b16 %v186
    %v760 = vunpack.c.l.b16 %v187
    %v761 = vunpack.c.h.b16 %v187
    %v762 = vunpack.c.l.b16 %v188
    %v763 = vunpack.c.h.b16 %v188
    %v764 = vunpack.c.l.b16 %v189
    %v765 = vunpack.c.h.b16 %v189
    %v766 = vunpack.c.l.b16 %v190
    %v767 = vunpack.c.h.b16 %v190
    %v768 = vunpack.c.l.b16 %v191
    %v769 = vunpack.c.h.b16 %v191
    %v770 = vunpack.c.l.b16 %v192
    %v771 = vunpack.c.h.b16 %v192
    %v772 = vunpack.c.l.b16 %v193
    %v773 = vunpack.c.h.b16 %v193
    %v774 = vunpack.c.l.b16 %v194
    %v775 = vunpack.c.h.b16 %v194
    %v776 = vunpack.c.l.b16 %v195
    %v777 = vunpack.c.h.b16 %v195
    %v778 = vunpack.c.l.b16 %v196
    %v779 = vunpack.c.h.b16 %v196
    %v780 = vunpack.c.l.b16 %v197
    %v781 = vunpack.c.h.b16 %v197
    %v782 = vunpack.c.l.b16 %v198
    %v783 = vunpack.c.h.b16 %v198
    %v784 = vunpack.c.l.b16 %v199
    %v785 = vunpack.c.h.b16 %v199
    %v786 = vunpack.c.l.b16 %v200
    %v787 = vunpack.c.h.b16 %v200
    %v788 = vunpack.c.l.b16 %v201
    %v789 = vunpack.c.h.b16 %v201
    %v790 = vunpack.c.l.b16 %v202
    %v791 = vunpack.c.h.b16 %v202
    %v792 = vunpack.c.l.b16 %v203
    %v793 = vunpack.c.h.b16 %v203
    %v794 = vunpack.c.l.b16 %v204
    %v795 = vunpack.c.h.b16 %v204
    %v796 = vunpack.c.l.b16 %v205
    %v797 = vunpack.c.h.b16 %v205
    %v798 = vunpack.c.l.b16 %v206
    %v799 = vunpack.c.h.b16 %v206
    %v800 = vunpack.c.l.b16 %v207
    %v801 = vunpack.c.h.b16 %v207
    %v802 = vunpack.c.l.b16 %v208
    %v803 = vunpack.c.h.b16 %v208
    %v804 = vunpack.c.l.b16 %v209
    %v805 = vunpack.c.h.b16 %v209
    %v806 = vunpack.c.l.b16 %v210
    %v807 = vunpack.c.h.b16 %v210
    %v808 = vunpack.c.l.b16 %v211
    %v809 = vunpack.c.h.b16 %v211
    %v810 = vunpack.c.l.b16 %v212
    %v811 = vunpack.c.h.b16 %v212
    %v812 = vunpack.c.l.b16 %v213
    %v813 = vunpack.c.h.b16 %v213
    %v814 = vunpack.c.l.b16 %v214
    %v815 = vunpack.c.h.b16 %v214
    %v816 = vunpack.c.l.b16 %v215
    %v817 = vunpack.c.h.b16 %v215
    %v818 = vunpack.c.l.b16 %v216
    %v819 = vunpack.c.h.b16 %v216
    %v820 = vunpack.c.l.b16 %v217
    %v821 = vunpack.c.h.b16 %v217
    %v822 = vunpack.c.l.b16 %v218
    %v823 = vunpack.c.h.b16 %v218
    %v824 = vunpack.c.l.b16 %v219
    %v825 = vunpack.c.h.b16 %v219
    %v826 = vunpack.c.l.b16 %v220
    %v827 = vunpack.c.h.b16 %v220
    %v828 = vunpack.c.l.b16 %v221
    %v829 = vunpack.c.h.b16 %v221
    %v830 = vunpack.c.l.b16 %v222
    %v831 = vunpack.c.h.b16 %v222
    %v832 = vunpack.c.l.b16 %v223
    %v833 = vunpack.c.h.b16 %v223
    %v834 = vunpack.c.l.b16 %v224
    %v835 = vunpack.c.h.b16 %v224
    %v836 = vunpack.c.l.b16 %v225
    %v837 = vunpack.c.h.b16 %v225
    %v838 = vunpack.c.l.b16 %v226
    %v839 = vunpack.c.h.b16 %v226
    %v840 = vunpack.c.l.b16 %v227
    %v841 = vunpack.c.h.b16 %v227
    %v842 = vunpack.c.l.b16 %v228
    %v843 = vunpack.c.h.b16 %v228
    %v844 = vunpack.c.l.b16 %v229
    %v845 = vunpack.c.h.b16 %v229
    %v846 = vunpack.c.l.b16 %v230
    %v847 = vunpack.c.h.b16 %v230
    %v848 = vunpack.c.l.b16 %v231
    %v849 = vunpack.c.h.b16 %v231
    %v850 = vunpack.c.l.b16 %v232
    %v851 = vunpack.c.h.b16 %v232
    %v852 = vunpack.c.l.b16 %v233
    %v853 = vunpack.c.h.b16 %v233
    %v854 = vunpack.c.l.b16 %v234
    %v855 = vunpack.c.h.b16 %v234
    %v856 = vunpack.c.l.b16 %v235
    %v857 = vunpack.c.h.b16 %v235
    %v858 = vunpack.c.l.b16 %v236
    %v859 = vunpack.c.h.b16 %v236
    %v860 = vunpack.c.l.b16 %v237
    %v861 = vunpack.c.h.b16 %v237
    %v862 = vunpack.c.l.b16 %v238
    %v863 = vunpack.c.h.b16 %v238
    %v864 = vunpack.c.l.b16 %v239
    %v865 = vunpack.c.h.b16 %v239
    %v866 = vunpack.c.l.b16 %v240
    %v867 = vunpack.c.h.b16 %v240
    %v868 = vunpack.c.l.b16 %v241
    %v869 = vunpack.c.h.b16 %v241
    %v870 = vunpack.c.l.b16 %v242
    %v871 = vunpack.c.h.b16 %v242
    %v872 = vunpack.c.l.b16 %v243
    %v873 = vunpack.c.h.b16 %v243
    %v874 = vunpack.c.l.b16 %v244
    %v875 = vunpack.c.h.b16 %v244
    %v876 = vunpack.c.l.b16 %v245
    %v877 = vunpack.c.h.b16 %v245
    %v878 = vunpack.c.l.b16 %v246
    %v879 = vunpack.c.h.b16 %v246
    %v880 = vunpack.c.l.b16 %v247
    %v881 = vunpack.c.h.b16 %v247
    %v882 = vunpack.c.l.b16 %v248
    %v883 = vunpack.c.h.b16 %v248
    %v884 = vunpack.c.l.b16 %v249
    %v885 = vunpack.c.h.b16 %v249
    %v886 = vunpack.c.l.b16 %v250
    %v887 = vunpack.c.h.b16 %v250
    %v888 = vunpack.c.l.b16 %v251
    %v889 = vunpack.c.h.b16 %v251
    %v890 = vunpack.c.l.b16 %v252
    %v891 = vunpack.c.h.b16 %v252
    %v892 = vunpack.c.l.b16 %v253
    %v893 = vunpack.c.h.b16 %v253
    %v894 = vunpack.c.l.b16 %v254
    %v895 = vunpack.c.h.b16 %v254
    %v896 = vunpack.c.l.b16 %v255
    %v897 = vunpack.c.h.b16 %v255
    %v898 = vunpack.c.l.b16 %v256
    %v899 = vunpack.c.h.b16 %v256
    %v900 = vunpack.c.l.b16 %v257
    %v901 = vunpack.c.h.b16 %v257
    %v902 = vunpack.c.l.b16 %v258
    %v903 = vunpack.c.h.b16 %v258
    %v904 = vunpack.c.l.b16 %v259
    %v905 = vunpack.c.h.b16 %v259
    %v906 = vunpack.c.l.b16 %v260
    %v907 = vunpack.c.h.b16 %v260
    %v908 = vunpack.c.l.b16 %v261
    %v909 = vunpack.c.h.b16 %v261
    %v910 = vunpack.c.l.b16 %v262
    %v911 = vunpack.c.h.b16 %v262
    %v912 = vunpack.c.l.b16 %v263
    %v913 = vunpack.c.h.b16 %v263
    %v914 = vunpack.c.l.b16 %v264
    %v915 = vunpack.c.h.b16 %v264
    %v916 = vunpack.c.l.b16 %v265
    %v917 = vunpack.c.h.b16 %v265
    %v918 = vunpack.c.l.b16 %v266
    %v919 = vunpack.c.h.b16 %v266
    %v920 = vunpack.c.l.b16 %v267
    %v921 = vunpack.c.h.b16 %v267
    %v922 = vunpack.c.l.b16 %v268
    %v923 = vunpack.c.h.b16 %v268
    %v924 = vunpack.c.l.b16 %v269
    %v925 = vunpack.c.h.b16 %v269
    %v926 = vunpack.c.l.b16 %v270
    %v927 = vunpack.c.h.b16 %v270
    %v928 = vunpack.c.l.b16 %v271
    %v929 = vunpack.c.h.b16 %v271
    %v930 = vunpack.c.l.b16 %v272
    %v931 = vunpack.c.h.b16 %v272
    %v932 = vunpack.c.l.b16 %v273
    %v933 = vunpack.c.h.b16 %v273
    %v934 = vunpack.c.l.b16 %v274
    %v935 = vunpack.c.h.b16 %v274
    %v936 = vunpack.c.l.b16 %v275
    %v937 = vunpack.c.h.b16 %v275
    %v938 = vunpack.c.l.b16 %v276
    %v939 = vunpack.c.h.b16 %v276
    %v940 = vunpack.c.l.b16 %v277
    %v941 = vunpack.c.h.b16 %v277
    %v942 = vunpack.c.l.b16 %v278
    %v943 = vunpack.c.h.b16 %v278
    %v944 = vunpack.c.l.b16 %v279
    %v945 = vunpack.c.h.b16 %v279
    %v946 = vunpack.c.l.b16 %v280
    %v947 = vunpack.c.h.b16 %v280
    %v948 = vunpack.c.l.b16 %v281
    %v949 = vunpack.c.h.b16 %v281
    %v950 = vunpack.c.l.b16 %v282
    %v951 = vunpack.c.h.b16 %v282
    %v952 = vunpack.c.l.b16 %v283
    %v953 = vunpack.c.h.b16 %v283
    %v954 = vunpack.c.l.b16 %v284
    %v955 = vunpack.c.h.b16 %v284
    %v956 = vunpack.c.l.b16 %v285
    %v957 = vunpack.c.h.b16 %v285
    %v958 = vunpack.c.l.b16 %v286
    %v959 = vunpack.c.h.b16 %v286
    %v960 = vunpack.c.l.b16 %v287
    %v961 = vunpack.c.h.b16 %v287
    %v962 = vunpack.c.l.b16 %v288
    %v963 = vunpack.c.h.b16 %v288
    %v964 = vunpack.c.l.b16 %v289
    %v965 = vunpack.c.h.b16 %v289
    %v966 = vunpack.c.l.b16 %v290
    %v967 = vunpack.c.h.b16 %v290
    %v968 = vunpack.c.l.b16 %v291
    %v969 = vunpack.c.h.b16 %v291
    %v970 = vunpack.c.l.b16 %v292
    %v971 = vunpack.c.h.b16 %v292
    %v972 = vunpack.c.l.b16 %v293
    %v973 = vunpack.c.h.b16 %v293
    %v974 = vunpack.c.l.b16 %v294
    %v975 = vunpack.c.h.b16 %v294
    %v976 = vunpack.c.l.b16 %v295
    %v977 = vunpack.c.h.b16 %v295
    %v978 = vunpack.c.l.b16 %v296
    %v979 = vunpack.c.h.b16 %v296
    %v980 = vunpack.c.l.b16 %v297
    %v981 = vunpack.c.h.b16 %v297
    %v982 = vunpack.c.l.b16 %v298
    %v983 = vunpack.c.h.b16 %v298
    %v984 = vunpack.c.l.b16 %v299
    %v985 = vunpack.c.h.b16 %v299
    %v986 = vunpack.c.l.b16 %v300
    %v987 = vunpack.c.h.b16 %v300
    %v988 = vunpack.c.l.b16 %v301
    %v989 = vunpack.c.h.b16 %v301
    %v990 = vunpack.c.l.b16 %v302
    %v991 = vunpack.c.h.b16 %v302
    %v992 = vunpack.c.l.b16 %v303
    %v993 = vunpack.c.h.b16 %v303
    %v994 = vunpack.c.l.b16 %v304
    %v995 = vunpack.c.h.b16 %v304
    %v996 = vunpack.c.l.b16 %v305
    %v997 = vunpack.c.h.b16 %v305
    %v998 = vunpack.c.l.b16 %v306
    %v999 = vunpack.c.h.b16 %v306
    %v1000 = vunpack.c.l.b16 %v307
    %v1001 = vunpack.c.h.b16 %v307
    %v1002 = vunpack.c.l.b16 %v308
    %v1003 = vunpack.c.h.b16 %v308
    %v1004 = vunpack.c.l.b16 %v309
    %v1005 = vunpack.c.h.b16 %v309
    %v1006 = vunpack.c.l.b16 %v310
    %v1007 = vunpack.c.h.b16 %v310
    %v1008 = vunpack.c.l.b16 %v311
    %v1009 = vunpack.c.h.b16 %v311
    %v1010 = vunpack.c.l.b16 %v312
    %v1011 = vunpack.c.h.b16 %v312
    %v1012 = vunpack.c.l.b16 %v313
    %v1013 = vunpack.c.h.b16 %v313
    %v1014 = vunpack.c.l.b16 %v314
    %v1015 = vunpack.c.h.b16 %v314
    %v1016 = vunpack.c.l.b16 %v315
    %v1017 = vunpack.c.h.b16 %v315
    %v1018 = vunpack.c.l.b16 %v316
    %v1019 = vunpack.c.h.b16 %v316
    %v1020 = vunpack.c.l.b16 %v317
    %v1021 = vunpack.c.h.b16 %v317
    %v1022 = vunpack.c.l.b16 %v318
    %v1023 = vunpack.c.h.b16 %v318
    %v1024 = vunpack.c.l.b16 %v319
    %v1025 = vunpack.c.h.b16 %v319
    %v1026 = vunpack.c.l.b16 %v320
    %v1027 = vunpack.c.h.b16 %v320
    %v1028 = vunpack.c.l.b16 %v321
    %v1029 = vunpack.c.h.b16 %v321
    %v1030 = vunpack.c.l.b16 %v322
    %v1031 = vunpack.c.h.b16 %v322
    %v1032 = vunpack.c.l.b16 %v323
    %v1033 = vunpack.c.h.b16 %v323
    %v1034 = vunpack.c.l.b16 %v324
    %v1035 = vunpack.c.h.b16 %v324
    %v1036 = vunpack.c.l.b16 %v325
    %v1037 = vunpack.c.h.b16 %v325
    %v1038 = vunpack.c.l.b16 %v326
    %v1039 = vunpack.c.h.b16 %v326
    %v1040 = vunpack.c.l.b16 %v327
    %v1041 = vunpack.c.h.b16 %v327
    %v1042 = vunpack.c.l.b16 %v328
    %v1043 = vunpack.c.h.b16 %v328
    %v1044 = vunpack.c.l.b16 %v329
    %v1045 = vunpack.c.h.b16 %v329
    %v1046 = vunpack.c.l.b16 %v330
    %v1047 = vunpack.c.h.b16 %v330
    %v1048 = vunpack.c.l.b16 %v331
    %v1049 = vunpack.c.h.b16 %v331
    %v1050 = vunpack.c.l.b16 %v332
    %v1051 = vunpack.c.h.b16 %v332
    %v1052 = vunpack.c.l.b16 %v333
    %v1053 = vunpack.c.h.b16 %v333
    %v1054 = vunpack.c.l.b16 %v334
    %v1055 = vunpack.c.h.b16 %v334
    %v1056 = vunpack.c.l.b16 %v335
    %v1057 = vunpack.c.h.b16 %v335
    %v1058 = vunpack.c.l.b16 %v336
    %v1059 = vunpack.c.h.b16 %v336
    %v1060 = vunpack.c.l.b16 %v337
    %v1061 = vunpack.c.h.b16 %v337
    %v1062 = vunpack.c.l.b16 %v338
    %v1063 = vunpack.c.h.b16 %v338
    %v1064 = vunpack.c.l.b16 %v339
    %v1065 = vunpack.c.h.b16 %v339
    %v1066 = vunpack.c.l.b16 %v340
    %v1067 = vunpack.c.h.b16 %v340
    %v1068 = vunpack.c.l.b16 %v341
    %v1069 = vunpack.c.h.b16 %v341
    %v1070 = vunpack.c.l.b16 %v342
    %v1071 = vunpack.c.h.b16 %v342
    %v1072 = vunpack.c.l.b16 %v343
    %v1073 = vunpack.c.h.b16 %v343
    %v1074 = vunpack.c.l.b16 %v344
    %v1075 = vunpack.c.h.b16 %v344
    %v1076 = vunpack.c.l.b16 %v345
    %v1077 = vunpack.c.h.b16 %v345
    %v1078 = vunpack.c.l.b16 %v346
    %v1079 = vunpack.c.h.b16 %v346
    %v1080 = vunpack.c.l.b16 %v347
    %v1081 = vunpack.c.h.b16 %v347
    %v1082 = vunpack.c.l.b16 %v348
    %v1083 = vunpack.c.h.b16 %v348
    %v1084 = vunpack.c.l.b16 %v349
    %v1085 = vunpack.c.h.b16 %v349
    %v1086 = vunpack.c.l.b16 %v350
    %v1087 = vunpack.c.h.b16 %v350
    %v1088 = vunpack.c.l.b16 %v351
    %v1089 = vunpack.c.h.b16 %v351
    %v1090 = vunpack.c.l.b16 %v352
    %v1091 = vunpack.c.h.b16 %v352
    %v1092 = vunpack.c.l.b16 %v353
    %v1093 = vunpack.c.h.b16 %v353
    %v1094 = vunpack.c.l.b16 %v354
    %v1095 = vunpack.c.h.b16 %v354
    %v1096 = vunpack.c.l.b16 %v355
    %v1097 = vunpack.c.h.b16 %v355
    %v1098 = vunpack.c.l.b16 %v356
    %v1099 = vunpack.c.h.b16 %v356
    %v1100 = vunpack.c.l.b16 %v357
    %v1101 = vunpack.c.h.b16 %v357
    %v1102 = vunpack.c.l.b16 %v358
    %v1103 = vunpack.c.h.b16 %v358
    %v1104 = vunpack.c.l.b16 %v359
    %v1105 = vunpack.c.h.b16 %v359
    %v1106 = vunpack.c.l.b16 %v360
    %v1107 = vunpack.c.h.b16 %v360
    %v1108 = vunpack.c.l.b16 %v361
    %v1109 = vunpack.c.h.b16 %v361
    %v1110 = vunpack.c.l.b16 %v362
    %v1111 = vunpack.c.h.b16 %v362
    %v1112 = vunpack.c.l.b16 %v363
    %v1113 = vunpack.c.h.b16 %v363
    %v1114 = vunpack.c.l.b16 %v364
    %v1115 = vunpack.c.h.b16 %v364
    %v1116 = vunpack.c.l.b16 %v365
    %v1117 = vunpack.c.h.b16 %v365
    %v1118 = vunpack.c.l.b16 %v366
    %v1119 = vunpack.c.h.b16 %v366
    %v1120 = vunpack.c.l.b16 %v367
    %v1121 = vunpack.c.h.b16 %v367
    %v1122 = vunpack.c.l.b16 %v368
    %v1123 = vunpack.c.h.b16 %v368
    %v1124 = vunpack.c.l.b16 %v369
    %v1125 = vunpack.c.h.b16 %v369
    %v1126 = vunpack.c.l.b16 %v370
    %v1127 = vunpack.c.h.b16 %v370
    %v1128 = vunpack.c.l.b16 %v371
    %v1129 = vunpack.c.h.b16 %v371
    %v1130 = vunpack.c.l.b16 %v372
    %v1131 = vunpack.c.h.b16 %v372
    %v1132 = vunpack.c.l.b16 %v373
    %v1133 = vunpack.c.h.b16 %v373
    %v1134 = vunpack.c.l.b16 %v374
    %v1135 = vunpack.c.h.b16 %v374
    %v1136 = vunpack.c.l.b16 %v375
    %v1137 = vunpack.c.h.b16 %v375
    %v1138 = vunpack.c.l.b16 %v376
    %v1139 = vunpack.c.h.b16 %v376
    %v1140 = vunpack.c.l.b16 %v377
    %v1141 = vunpack.c.h.b16 %v377
    %v1142 = vunpack.c.l.b16 %v378
    %v1143 = vunpack.c.h.b16 %v378
    %v1144 = vunpack.c.l.b16 %v379
    %v1145 = vunpack.c.h.b16 %v379
    %v1146 = vunpack.c.l.b16 %v380
    %v1147 = vunpack.c.h.b16 %v380
    %v1148 = vunpack.c.l.b16 %v381
    %v1149 = vunpack.c.h.b16 %v381
    %v1150 = vunpack.c.l.b16 %v382
    %v1151 = vunpack.c.h.b16 %v382
    %v1152 = vunpack.c.l.b16 %v383
    %v1153 = vunpack.c.h.b16 %v383
    %v1154 = vunpack.c.l.b16 %v384
    %v1155 = vunpack.c.h.b16 %v384
    %v1156 = vunpack.c.l.b16 %v385
    %v1157 = vunpack.c.h.b16 %v385
    %v1158 = vunpack.c.l.b16 %v386
    %v1159 = vunpack.c.h.b16 %v386
    %v1160 = vunpack.c.l.b16 %v387
    %v1161 = vunpack.c.h.b16 %v387
    %v1162 = vunpack.c.l.b16 %v388
    %v1163 = vunpack.c.h.b16 %v388
    %v1164 = vunpack.c.l.b16 %v389
    %v1165 = vunpack.c.h.b16 %v389
    %v1166 = vunpack.c.l.b16 %v390
    %v1167 = vunpack.c.h.b16 %v390
    %v1168 = vunpack.c.l.b16 %v391
    %v1169 = vunpack.c.h.b16 %v391
    %v1170 = vunpack.c.l.b16 %v392
    %v1171 = vunpack.c.h.b16 %v392
    %v1172 = vunpack.c.l.b16 %v393
    %v1173 = vunpack.c.h.b16 %v393
    %v1174 = vunpack.c.l.b16 %v394
    %v1175 = vunpack.c.h.b16 %v394
    %v1176 = vunpack.c.l.b16 %v395
    %v1177 = vunpack.c.h.b16 %v395
    %v1178 = vunpack.c.l.b16 %v396
    %v1179 = vunpack.c.h.b16 %v396
    %v1180 = vunpack.c.l.b16 %v397
    %v1181 = vunpack.c.h.b16 %v397
    %v1182 = vunpack.c.l.b16 %v398
    %v1183 = vunpack.c.h.b16 %v398
    %v1184 = vunpack.c.l.b16 %v399
    %v1185 = vunpack.c.h.b16 %v399
    %v1186 = vunpack.c.l.b16 %v400
    %v1187 = vunpack.c.h.b16 %v400
    %v1188 = vunpack.c.l.b16 %v401
    %v1189 = vunpack.c.h.b16 %v401
    %v1190 = vunpack.c.l.b16 %v402
    %v1191 = vunpack.c.h.b16 %v402
    %v1192 = vunpack.c.l.b16 %v403
    %v1193 = vunpack.c.h.b16 %v403
    %v1194 = vpack.c.b16 %v686, %v682
    %v1195 = vpack.c.b16 %v687, %v683
    %v1196 = vpack.c.b16 %v688, %v684
    %v1197 = vpack.c.b16 %v689, %v685
    %v1198 = vpack.c.b16 %v694, %v690
    %v1199 = vpack.c.b16 %v695, %v691
    %v1200 = vpack.c.b16 %v696, %v692
    %v1201 = vpack.c.b16 %v697, %v693
    %v1202 = vpack.c.b16 %v702, %v698
    %v1203 = vpack.c.b16 %v703, %v699
    %v1204 = vpack.c.b16 %v704, %v700
    %v1205 = vpack.c.b16 %v705, %v701
    %v1206 = vpack.c.b16 %v710, %v706
    %v1207 = vpack.c.b16 %v711, %v707
    %v1208 = vpack.c.b16 %v712, %v708
    %v1209 = vpack.c.b16 %v713, %v709
    %v1210 = vpack.c.b16 %v718, %v714
    %v1211 = vpack.c.b16 %v719, %v715
    %v1212 = vpack.c.b16 %v720, %v716
    %v1213 = vpack.c.b16 %v721, %v717
    %v1214 = vpack.c.b16 %v726, %v722
    %v1215 = vpack.c.b16 %v727, %v723
    %v1216 = vpack.c.b16 %v728, %v724
    %v1217 = vpack.c.b16 %v729, %v725
    %v1218 = vpack.c.b16 %v734, %v730
    %v1219 = vpack.c.b16 %v735, %v731
    %v1220 = vpack.c.b16 %v736, %v732
    %v1221 = vpack.c.b16 %v737, %v733
    %v1222 = vpack.c.b16 %v742, %v738
    %v1223 = vpack.c.b16 %v743, %v739
    %v1224 = vpack.c.b16 %v744, %v740
    %v1225 = vpack.c.b16 %v745, %v741
    %v1226 = vpack.c.b16 %v750, %v746
    %v1227 = vpack.c.b16 %v751, %v747
    %v1228 = vpack.c.b16 %v752, %v748
    %v1229 = vpack.c.b16 %v753, %v749
    %v1230 = vpack.c.b16 %v758, %v754
    %v1231 = vpack.c.b16 %v759, %v755
    %v1232 = vpack.c.b16 %v760, %v756
    %v1233 = vpack.c.b16 %v761, %v757
    %v1234 = vpack.c.b16 %v766, %v762
    %v1235 = vpack.c.b16 %v767, %v763
    %v1236 = vpack.c.b16 %v768, %v764
    %v1237 = vpack.c.b16 %v769, %v765
    %v1238 = vpack.c.b16 %v774, %v770
    %v1239 = vpack.c.b16 %v775, %v771
    %v1240 = vpack.c.b16 %v776, %v772
    %v1241 = vpack.c.b16 %v777, %v773
    %v1242 = vpack.c.b16 %v782, %v778
    %v1243 = vpack.c.b16 %v783, %v779
    %v1244 = vpack.c.b16 %v784, %v780
    %v1245 = vpack.c.b16 %v785, %v781
    %v1246 = vpack.c.b16 %v790, %v786
    %v1247 = vpack.c.b16 %v791, %v787
    %v1248 = vpack.c.b16 %v792, %v788
    %v1249 = vpack.c.b16 %v793, %v789
    %v1250 = vpack.c.b16 %v798, %v794
    %v1251 = vpack.c.b16 %v799, %v795
    %v1252 = vpack.c.b16 %v800, %v796
    %v1253 = vpack.c.b16 %v801, %v797
    %v1254 = vpack.c.b16 %v806, %v802
    %v1255 = vpack.c.b16 %v807, %v803
    %v1256 = vpack.c.b16 %v808, %v804
    %v1257 = vpack.c.b16 %v809, %v805
    %v1258 = vpack.c.b16 %v814, %v810
    %v1259 = vpack.c.b16 %v815, %v811
    %v1260 = vpack.c.b16 %v816, %v812
    %v1261 = vpack.c.b16 %v817, %v813
    %v1262 = vpack.c.b16 %v822, %v818
    %v1263 = vpack.c.b16 %v823, %v819
    %v1264 = vpack.c.b16 %v824, %v820
    %v1265 = vpack.c.b16 %v825, %v821
    %v1266 = vpack.c.b16 %v830, %v826
    %v1267 = vpack.c.b16 %v831, %v827
    %v1268 = vpack.c.b16 %v832, %v828
    %v1269 = vpack.c.b16 %v833, %v829
    %v1270 = vpack.c.b16 %v838, %v834
    %v1271 = vpack.c.b16 %v839, %v835
    %v1272 = vpack.c.b16 %v840, %v836
    %v1273 = vpack.c.b16 %v841, %v837
    %v1274 = vpack.c.b16 %v846, %v842
    %v1275 = vpack.c.b16 %v847, %v843
    %v1276 = vpack.c.b16 %v848, %v844
    %v1277 = vpack.c.b16 %v849, %v845
    %v1278 = vpack.c.b16 %v854, %v850
    %v1279 = vpack.c.b16 %v855, %v851
    %v1280 = vpack.c.b16 %v856, %v852
    %v1281 = vpack.c.b16 %v857, %v853
    %v1282 = vpack.c.b16 %v862, %v858
    %v1283 = vpack.c.b16 %v863, %v859
    %v1284 = vpack.c.b16 %v864, %v860
    %v1285 = vpack.c.b16 %v865, %v861
    %v1286 = vpack.c.b16 %v870, %v866
    %v1287 = vpack.c.b16 %v871, %v867
    %v1288 = vpack.c.b16 %v872, %v868
    %v1289 = vpack.c.b16 %v873, %v869
    %v1290 = vpack.c.b16 %v878, %v874
    %v1291 = vpack.c.b16 %v879, %v875
    %v1292 = vpack.c.b16 %v880, %v876
    %v1293 = vpack.c.b16 %v881, %v877
    %v1294 = vpack.c.b16 %v886, %v882
    %v1295 = vpack.c.b16 %v887, %v883
    %v1296 = vpack.c.b16 %v888, %v884
    %v1297 = vpack.c.b16 %v889, %v885
    %v1298 = vpack.c.b16 %v894, %v890
    %v1299 = vpack.c.b16 %v895, %v891
    %v1300 = vpack.c.b16 %v896, %v892
    %v1301 = vpack.c.b16 %v897, %v893
    %v1302 = vpack.c.b16 %v902, %v898
    %v1303 = vpack.c.b16 %v903, %v899
    %v1304 = vpack.c.b16 %v904, %v900
    %v1305 = vpack.c.b16 %v905, %v901
    %v1306 = vpack.c.b16 %v910, %v906
    %v1307 = vpack.c.b16 %v911, %v907
    %v1308 = vpack.c.b16 %v912, %v908
    %v1309 = vpack.c.b16 %v913, %v909
    %v1310 = vpack.c.b16 %v918, %v914
    %v1311 = vpack.c.b16 %v919, %v915
    %v1312 = vpack.c.b16 %v920, %v916
    %v1313 = vpack.c.b16 %v921, %v917
    %v1314 = vpack.c.b16 %v926, %v922
    %v1315 = vpack.c.b16 %v927, %v923
    %v1316 = vpack.c.b16 %v928, %v924
    %v1317 = vpack.c.b16 %v929, %v925
    %v1318 = vpack.c.b16 %v934, %v930
    %v1319 = vpack.c.b16 %v935, %v931
    %v1320 = vpack.c.b16 %v936, %v932
    %v1321 = vpack.c.b16 %v937, %v933
    %v1322 = vpack.c.b16 %v942, %v938
    %v1323 = vpack.c.b16 %v943, %v939
    %v1324 = vpack.c.b16 %v944, %v940
    %v1325 = vpack.c.b16 %v945, %v941
    %v1326 = vpack.c.b16 %v950, %v946
    %v1327 = vpack.c.b16 %v951, %v947
    %v1328 = vpack.c.b16 %v952, %v948
    %v1329 = vpack.c.b16 %v953, %v949
    %v1330 = vpack.c.b16 %v958, %v954
    %v1331 = vpack.c.b16 %v959, %v955
    %v1332 = vpack.c.b16 %v960, %v956
    %v1333 = vpack.c.b16 %v961, %v957
    %v1334 = vpack.c.b16 %v966, %v962
    %v1335 = vpack.c.b16 %v967, %v963
    %v1336 = vpack.c.b16 %v968, %v964
    %v1337 = vpack.c.b16 %v969, %v965
    %v1338 = vpack.c.b16 %v974, %v970
    %v1339 = vpack.c.b16 %v975, %v971
    %v1340 = vpack.c.b16 %v976, %v972
    %v1341 = vpack.c.b16 %v977, %v973
    %v1342 = vpack.c.b16 %v982, %v978
    %v1343 = vpack.c.b16 %v983, %v979
    %v1344 = vpack.c.b16 %v984, %v980
    %v1345 = vpack.c.b16 %v985, %v981
    %v1346 = vpack.c.b16 %v990, %v986
    %v1347 = vpack.c.b16 %v991, %v987
    %v1348 = vpack.c.b16 %v992, %v988
    %v1349 = vpack.c.b16 %v993, %v989
    %v1350 = vpack.c.b16 %v998, %v994
    %v1351 = vpack.c.b16 %v999, %v995
    %v1352 = vpack.c.b16 %v1000, %v996
    %v1353 = vpack.c.b16 %v1001, %v997
    %v1354 = vpack.c.b16 %v1006, %v1002
    %v1355 = vpack.c.b16 %v1007, %v1003
    %v1356 = vpack.c.b16 %v1008, %v1004
    %v1357 = vpack.c.b16 %v1009, %v1005
    %v1358 = vpack.c.b16 %v1014, %v1010
    %v1359 = vpack.c.b16 %v1015, %v1011
    %v1360 = vpack.c.b16 %v1016, %v1012
    %v1361 = vpack.c.b16 %v1017, %v1013
    %v1362 = vpack.c.b16 %v1022, %v1018
    %v1363 = vpack.c.b16 %v1023, %v1019
    %v1364 = vpack.c.b16 %v1024, %v1020
    %v1365 = vpack.c.b16 %v1025, %v1021
    %v1366 = vpack.c.b16 %v1030, %v1026
    %v1367 = vpack.c.b16 %v1031, %v1027
    %v1368 = vpack.c.b16 %v1032, %v1028
    %v1369 = vpack.c.b16 %v1033, %v1029
    %v1370 = vpack.c.b16 %v1038, %v1034
    %v1371 = vpack.c.b16 %v1039, %v1035
    %v1372 = vpack.c.b16 %v1040, %v1036
    %v1373 = vpack.c.b16 %v1041, %v1037
    %v1374 = vpack.c.b16 %v1046, %v1042
    %v1375 = vpack.c.b16 %v1047, %v1043
    %v1376 = vpack.c.b16 %v1048, %v1044
    %v1377 = vpack.c.b16 %v1049, %v1045
    %v1378 = vpack.c.b16 %v1054, %v1050
    %v1379 = vpack.c.b16 %v1055, %v1051
    %v1380 = vpack.c.b16 %v1056, %v1052
    %v1381 = vpack.c.b16 %v1057, %v1053
    %v1382 = vpack.c.b16 %v1062, %v1058
    %v1383 = vpack.c.b16 %v1063, %v1059
    %v1384 = vpack.c.b16 %v1064, %v1060
    %v1385 = vpack.c.b16 %v1065, %v1061
    %v1386 = vpack.c.b16 %v1070, %v1066
    %v1387 = vpack.c.b16 %v1071, %v1067
    %v1388 = vpack.c.b16 %v1072, %v1068
    %v1389 = vpack.c.b16 %v1073, %v1069
    %v1390 = vpack.c.b16 %v1078, %v1074
    %v1391 = vpack.c.b16 %v1079, %v1075
    %v1392 = vpack.c.b16 %v1080, %v1076
    %v1393 = vpack.c.b16 %v1081, %v1077
    %v1394 = vpack.c.b16 %v1086, %v1082
    %v1395 = vpack.c.b16 %v1087, %v1083
    %v1396 = vpack.c.b16 %v1088, %v1084
    %v1397 = vpack.c.b16 %v1089, %v1085
    %v1398 = vpack.c.b16 %v1094, %v1090
    %v1399 = vpack.c.b16 %v1095, %v1091
    %v1400 = vpack.c.b16 %v1096, %v1092
    %v1401 = vpack.c.b16 %v1097, %v1093
    %v1402 = vpack.c.b16 %v1102, %v1098
    %v1403 = vpack.c.b16 %v1103, %v1099
    %v1404 = vpack.c.b16 %v1104, %v1100
    %v1405 = vpack.c.b16 %v1105, %v1101
    %v1406 = vpack.c.b16 %v1110, %v1106
    %v1407 = vpack.c.b16 %v1111, %v1107
    %v1408 = vpack.c.b16 %v1112, %v1108
    %v1409 = vpack.c.b16 %v1113, %v1109
    %v1410 = vpack.c.b16 %v1118, %v1114
    %v1411 = vpack.c.b16 %v1119, %v1115
    %v1412 = vpack.c.b16 %v1120, %v1116
    %v1413 = vpack.c.b16 %v1121, %v1117
    %v1414 = vpack.c.b16 %v1126, %v1122
    %v1415 = vpack.c.b16 %v1127, %v1123
    %v1416 = vpack.c.b16 %v1128, %v1124
    %v1417 = vpack.c.b16 %v1129, %v1125
    %v1418 = vpack.c.b16 %v1134, %v1130
    %v1419 = vpack.c.b16 %v1135, %v1131
    %v1420 = vpack.c.b16 %v1136, %v1132
    %v1421 = vpack.c.b16 %v1137, %v1133
    %v1422 = vpack.c.b16 %v1142, %v1138
    %v1423 = vpack.c.b16 %v1143, %v1139
    %v1424 = vpack.c.b16 %v1144, %v1140
    %v1425 = vpack.c.b16 %v1145, %v1141
    %v1426 = vpack.c.b16 %v1150, %v1146
    %v1427 = vpack.c.b16 %v1151, %v1147
    %v1428 = vpack.c.b16 %v1152, %v1148
    %v1429 = vpack.c.b16 %v1153, %v1149
    %v1430 = vpack.c.b16 %v1158, %v1154
    %v1431 = vpack.c.b16 %v1159, %v1155
    %v1432 = vpack.c.b16 %v1160, %v1156
    %v1433 = vpack.c.b16 %v1161, %v1157
    %v1434 = vpack.c.b16 %v1166, %v1162
    %v1435 = vpack.c.b16 %v1167, %v1163
    %v1436 = vpack.c.b16 %v1168, %v1164
    %v1437 = vpack.c.b16 %v1169, %v1165
    %v1438 = vpack.c.b16 %v1174, %v1170
    %v1439 = vpack.c.b16 %v1175, %v1171
    %v1440 = vpack.c.b16 %v1176, %v1172
    %v1441 = vpack.c.b16 %v1177, %v1173
    %v1442 = vpack.c.b16 %v1182, %v1178
    %v1443 = vpack.c.b16 %v1183, %v1179
    %v1444 = vpack.c.b16 %v1184, %v1180
    %v1445 = vpack.c.b16 %v1185, %v1181
    %v1446 = vpack.c.b16 %v1190, %v1186
    %v1447 = vpack.c.b16 %v1191, %v1187
    %v1448 = vpack.c.b16 %v1192, %v1188
    %v1449 = vpack.c.b16 %v1193, %v1189
    %1706 = vmatprep.subr.bf16.mxu0 %v1195
    %1707 = vmatpush1.bf16.msra.mxu0 %v1194
    %1708 = vmatprep.subr.bf16.mxu0 %v1199
    %1709 = vmatpush1.bf16.msra.mxu0 %v1198
    %1710 = vmatprep.subr.bf16.mxu0 %v1203
    %1711 = vmatpush1.bf16.msra.mxu0 %v1202
    %1712 = vmatprep.subr.bf16.mxu0 %v1207
    %1713 = vmatpush1.bf16.msra.mxu0 %v1206
    %1714 = vmatprep.subr.bf16.mxu0 %v1211
    %1715 = vmatpush1.bf16.msra.mxu0 %v1210
    %1716 = vmatprep.subr.bf16.mxu0 %v1215
    %1717 = vmatpush1.bf16.msra.mxu0 %v1214
    %1718 = vmatprep.subr.bf16.mxu0 %v1219
    %1719 = vmatpush1.bf16.msra.mxu0 %v1218
    %1720 = vmatprep.subr.bf16.mxu0 %v1223
    %1721 = vmatpush1.bf16.msra.mxu0 %v1222
    %1722 = vmatprep.subr.bf16.mxu0 %v1227
    %1723 = vmatpush1.bf16.msra.mxu0 %v1226
    %1724 = vmatprep.subr.bf16.mxu0 %v1231
    %1725 = vmatpush1.bf16.msra.mxu0 %v1230
    %1726 = vmatprep.subr.bf16.mxu0 %v1235
    %1727 = vmatpush1.bf16.msra.mxu0 %v1234
    %1728 = vmatprep.subr.bf16.mxu0 %v1239
    %1729 = vmatpush1.bf16.msra.mxu0 %v1238
    %1730 = vmatprep.subr.bf16.mxu0 %v1243
    %1731 = vmatpush1.bf16.msra.mxu0 %v1242
    %1732 = vmatprep.subr.bf16.mxu0 %v1247
    %1733 = vmatpush1.bf16.msra.mxu0 %v1246
    %1734 = vmatprep.subr.bf16.mxu0 %v1251
    %1735 = vmatpush1.bf16.msra.mxu0 %v1250
    %1736 = vmatprep.subr.bf16.mxu0 %v1255
    %1737 = vmatpush1.bf16.msra.mxu0 %v1254
    %1738 = vmatprep.mubr.bf16.mxu0 %v141
    %1739 = vmatmul.mubr.bf16.gmra.mrb[0].mxu0 %v140
    %v1740 = vpop.f32.mrb[0].mxu0
    %v1741 = vadd.f32 %v409, %v1740
    %v1742 = vpop.f32.mrb[0].mxu0
    %v1743 = vadd.f32 %v413, %v1742
    %v1744 = vpop.f32.mrb[0].mxu0
    %v1745 = vpop.f32.mrb[0].mxu0
    %1746 = vdwg.mxu0
    %1747 = vmatprep.subr.bf16.mxu0 %v1259
    %1748 = vmatpush1.bf16.msra.mxu0 %v1258
    %1749 = vmatprep.subr.bf16.mxu0 %v1263
    %1750 = vmatpush1.bf16.msra.mxu0 %v1262
    %1751 = vmatprep.subr.bf16.mxu0 %v1267
    %1752 = vmatpush1.bf16.msra.mxu0 %v1266
    %1753 = vmatprep.subr.bf16.mxu0 %v1271
    %1754 = vmatpush1.bf16.msra.mxu0 %v1270
    %1755 = vmatprep.subr.bf16.mxu0 %v1275
    %1756 = vmatpush1.bf16.msra.mxu0 %v1274
    %1757 = vmatprep.subr.bf16.mxu0 %v1279
    %1758 = vmatpush1.bf16.msra.mxu0 %v1278
    %1759 = vmatprep.subr.bf16.mxu0 %v1283
    %1760 = vmatpush1.bf16.msra.mxu0 %v1282
    %1761 = vmatprep.subr.bf16.mxu0 %v1287
    %1762 = vmatpush1.bf16.msra.mxu0 %v1286
    %1763 = vmatprep.subr.bf16.mxu0 %v1291
    %1764 = vmatpush1.bf16.msra.mxu0 %v1290
    %1765 = vmatprep.subr.bf16.mxu0 %v1295
    %1766 = vmatpush1.bf16.msra.mxu0 %v1294
    %1767 = vmatprep.subr.bf16.mxu0 %v1299
    %1768 = vmatpush1.bf16.msra.mxu0 %v1298
    %1769 = vmatprep.subr.bf16.mxu0 %v1303
    %1770 = vmatpush1.bf16.msra.mxu0 %v1302
    %1771 = vmatprep.subr.bf16.mxu0 %v1307
    %1772 = vmatpush1.bf16.msra.mxu0 %v1306
    %1773 = vmatprep.subr.bf16.mxu0 %v1311
    %1774 = vmatpush1.bf16.msra.mxu0 %v1310
    %1775 = vmatprep.subr.bf16.mxu0 %v1315
    %1776 = vmatpush1.bf16.msra.mxu0 %v1314
    %1777 = vmatprep.subr.bf16.mxu0 %v1319
    %1778 = vmatpush1.bf16.msra.mxu0 %v1318
    %1779 = vmatprep.mubr.bf16.mxu0 %v143
    %1780 = vmatmul.mubr.bf16.gmra.mrb[0].mxu0 %v142
    %v1781 = vpop.f32.mrb[0].mxu0
    %v1782 = vadd.f32 %v1741, %v1781
    %v1783 = vpop.f32.mrb[0].mxu0
    %v1784 = vadd.f32 %v1743, %v1783
    %v1785 = vpop.f32.mrb[0].mxu0
    %v1786 = vpop.f32.mrb[0].mxu0
    %1787 = vdwg.mxu0
    %1788 = vmatprep.subr.bf16.mxu0 %v1323
    %1789 = vmatpush1.bf16.msra.mxu0 %v1322
    %1790 = vmatprep.subr.bf16.mxu0 %v1327
    %1791 = vmatpush1.bf16.msra.mxu0 %v1326
    %1792 = vmatprep.subr.bf16.mxu0 %v1331
    %1793 = vmatpush1.bf16.msra.mxu0 %v1330
    %1794 = vmatprep.subr.bf16.mxu0 %v1335
    %1795 = vmatpush1.bf16.msra.mxu0 %v1334
    %1796 = vmatprep.subr.bf16.mxu0 %v1339
    %1797 = vmatpush1.bf16.msra.mxu0 %v1338
    %1798 = vmatprep.subr.bf16.mxu0 %v1343
    %1799 = vmatpush1.bf16.msra.mxu0 %v1342
    %1800 = vmatprep.subr.bf16.mxu0 %v1347
    %1801 = vmatpush1.bf16.msra.mxu0 %v1346
    %1802 = vmatprep.subr.bf16.mxu0 %v1351
    %1803 = vmatpush1.bf16.msra.mxu0 %v1350
    %1804 = vmatprep.subr.bf16.mxu0 %v1355
    %1805 = vmatpush1.bf16.msra.mxu0 %v1354
    %1806 = vmatprep.subr.bf16.mxu0 %v1359
    %1807 = vmatpush1.bf16.msra.mxu0 %v1358
    %1808 = vmatprep.subr.bf16.mxu0 %v1363
    %1809 = vmatpush1.bf16.msra.mxu0 %v1362
    %1810 = vmatprep.subr.bf16.mxu0 %v1367
    %1811 = vmatpush1.bf16.msra.mxu0 %v1366
    %1812 = vmatprep.subr.bf16.mxu0 %v1371
    %1813 = vmatpush1.bf16.msra.mxu0 %v1370
    %1814 = vmatprep.subr.bf16.mxu0 %v1375
    %1815 = vmatpush1.bf16.msra.mxu0 %v1374
    %1816 = vmatprep.subr.bf16.mxu0 %v1379
    %1817 = vmatpush1.bf16.msra.mxu0 %v1378
    %1818 = vmatprep.subr.bf16.mxu0 %v1383
    %1819 = vmatpush1.bf16.msra.mxu0 %v1382
    %1820 = vmatprep.mubr.bf16.mxu0 %v145
    %1821 = vmatmul.mubr.bf16.gmra.mrb[0].mxu0 %v144
    %v1822 = vpop.f32.mrb[0].mxu0
    %v1823 = vadd.f32 %v1782, %v1822
    %v1824 = vpop.f32.mrb[0].mxu0
    %v1825 = vadd.f32 %v1784, %v1824
    %v1826 = vpop.f32.mrb[0].mxu0
    %v1827 = vpop.f32.mrb[0].mxu0
    %1828 = vdwg.mxu0
    %1829 = vmatprep.subr.bf16.mxu0 %v1387
    %1830 = vmatpush1.bf16.msra.mxu0 %v1386
    %1831 = vmatprep.subr.bf16.mxu0 %v1391
    %1832 = vmatpush1.bf16.msra.mxu0 %v1390
    %1833 = vmatprep.subr.bf16.mxu0 %v1395
    %1834 = vmatpush1.bf16.msra.mxu0 %v1394
    %1835 = vmatprep.subr.bf16.mxu0 %v1399
    %1836 = vmatpush1.bf16.msra.mxu0 %v1398
    %1837 = vmatprep.subr.bf16.mxu0 %v1403
    %1838 = vmatpush1.bf16.msra.mxu0 %v1402
    %1839 = vmatprep.subr.bf16.mxu0 %v1407
    %1840 = vmatpush1.bf16.msra.mxu0 %v1406
    %1841 = vmatprep.subr.bf16.mxu0 %v1411
    %1842 = vmatpush1.bf16.msra.mxu0 %v1410
    %1843 = vmatprep.subr.bf16.mxu0 %v1415
    %1844 = vmatpush1.bf16.msra.mxu0 %v1414
    %1845 = vmatprep.subr.bf16.mxu0 %v1419
    %1846 = vmatpush1.bf16.msra.mxu0 %v1418
    %1847 = vmatprep.subr.bf16.mxu0 %v1423
    %1848 = vmatpush1.bf16.msra.mxu0 %v1422
    %1849 = vmatprep.subr.bf16.mxu0 %v1427
    %1850 = vmatpush1.bf16.msra.mxu0 %v1426
    %1851 = vmatprep.subr.bf16.mxu0 %v1431
    %1852 = vmatpush1.bf16.msra.mxu0 %v1430
    %1853 = vmatprep.subr.bf16.mxu0 %v1435
    %1854 = vmatpush1.bf16.msra.mxu0 %v1434
    %1855 = vmatprep.subr.bf16.mxu0 %v1439
    %1856 = vmatpush1.bf16.msra.mxu0 %v1438
    %1857 = vmatprep.subr.bf16.mxu0 %v1443
    %1858 = vmatpush1.bf16.msra.mxu0 %v1442
    %1859 = vmatprep.subr.bf16.mxu0 %v1447
    %1860 = vmatpush1.bf16.msra.mxu0 %v1446
    %1861 = vmatprep.mubr.bf16.mxu0 %v147
    %1862 = vmatmul.mubr.bf16.gmra.mrb[0].mxu0 %v146
    %v1863 = vpop.f32.mrb[0].mxu0
    %v1864 = vadd.f32 %v1823, %v1863
    %v1865 = vpop.f32.mrb[0].mxu0
    %v1866 = vadd.f32 %v1825, %v1865
    %v1867 = vpop.f32.mrb[0].mxu0
    %v1868 = vpop.f32.mrb[0].mxu0
    %1869 = vdwg.mxu0
    %1870 = vmatprep.subr.bf16.mxu0 %v1197
    %1871 = vmatpush1.bf16.msra.mxu0 %v1196
    %1872 = vmatprep.subr.bf16.mxu0 %v1201
    %1873 = vmatpush1.bf16.msra.mxu0 %v1200
    %1874 = vmatprep.subr.bf16.mxu0 %v1205
    %1875 = vmatpush1.bf16.msra.mxu0 %v1204
    %1876 = vmatprep.subr.bf16.mxu0 %v1209
    %1877 = vmatpush1.bf16.msra.mxu0 %v1208
    %1878 = vmatprep.subr.bf16.mxu0 %v1213
    %1879 = vmatpush1.bf16.msra.mxu0 %v1212
    %1880 = vmatprep.subr.bf16.mxu0 %v1217
    %1881 = vmatpush1.bf16.msra.mxu0 %v1216
    %1882 = vmatprep.subr.bf16.mxu0 %v1221
    %1883 = vmatpush1.bf16.msra.mxu0 %v1220
    %1884 = vmatprep.subr.bf16.mxu0 %v1225
    %1885 = vmatpush1.bf16.msra.mxu0 %v1224
    %1886 = vmatprep.subr.bf16.mxu0 %v1229
    %1887 = vmatpush1.bf16.msra.mxu0 %v1228
    %1888 = vmatprep.subr.bf16.mxu0 %v1233
    %1889 = vmatpush1.bf16.msra.mxu0 %v1232
    %1890 = vmatprep.subr.bf16.mxu0 %v1237
    %1891 = vmatpush1.bf16.msra.mxu0 %v1236
    %1892 = vmatprep.subr.bf16.mxu0 %v1241
    %1893 = vmatpush1.bf16.msra.mxu0 %v1240
    %1894 = vmatprep.subr.bf16.mxu0 %v1245
    %1895 = vmatpush1.bf16.msra.mxu0 %v1244
    %1896 = vmatprep.subr.bf16.mxu0 %v1249
    %1897 = vmatpush1.bf16.msra.mxu0 %v1248
    %1898 = vmatprep.subr.bf16.mxu0 %v1253
    %1899 = vmatpush1.bf16.msra.mxu0 %v1252
    %1900 = vmatprep.subr.bf16.mxu0 %v1257
    %1901 = vmatpush1.bf16.msra.mxu0 %v1256
    %1902 = vmatprep.mubr.bf16.mxu0 %v141
    %1903 = vmatmul.mubr.bf16.gmra.mrb[0].mxu0 %v140
    %v1904 = vpop.f32.mrb[0].mxu0
    %v1905 = vadd.f32 %v417, %v1904
    %v1906 = vpop.f32.mrb[0].mxu0
    %v1907 = vadd.f32 %v421, %v1906
    %v1908 = vpop.f32.mrb[0].mxu0
    %v1909 = vpop.f32.mrb[0].mxu0
    %1910 = vdwg.mxu0
    %1911 = vmatprep.subr.bf16.mxu0 %v1261
    %1912 = vmatpush1.bf16.msra.mxu0 %v1260
    %1913 = vmatprep.subr.bf16.mxu0 %v1265
    %1914 = vmatpush1.bf16.msra.mxu0 %v1264
    %1915 = vmatprep.subr.bf16.mxu0 %v1269
    %1916 = vmatpush1.bf16.msra.mxu0 %v1268
    %1917 = vmatprep.subr.bf16.mxu0 %v1273
    %1918 = vmatpush1.bf16.msra.mxu0 %v1272
    %1919 = vmatprep.subr.bf16.mxu0 %v1277
    %1920 = vmatpush1.bf16.msra.mxu0 %v1276
    %1921 = vmatprep.subr.bf16.mxu0 %v1281
    %1922 = vmatpush1.bf16.msra.mxu0 %v1280
    %1923 = vmatprep.subr.bf16.mxu0 %v1285
    %1924 = vmatpush1.bf16.msra.mxu0 %v1284
    %1925 = vmatprep.subr.bf16.mxu0 %v1289
    %1926 = vmatpush1.bf16.msra.mxu0 %v1288
    %1927 = vmatprep.subr.bf16.mxu0 %v1293
    %1928 = vmatpush1.bf16.msra.mxu0 %v1292
    %1929 = vmatprep.subr.bf16.mxu0 %v1297
    %1930 = vmatpush1.bf16.msra.mxu0 %v1296
    %1931 = vmatprep.subr.bf16.mxu0 %v1301
    %1932 = vmatpush1.bf16.msra.mxu0 %v1300
    %1933 = vmatprep.subr.bf16.mxu0 %v1305
    %1934 = vmatpush1.bf16.msra.mxu0 %v1304
    %1935 = vmatprep.subr.bf16.mxu0 %v1309
    %1936 = vmatpush1.bf16.msra.mxu0 %v1308
    %1937 = vmatprep.subr.bf16.mxu0 %v1313
    %1938 = vmatpush1.bf16.msra.mxu0 %v1312
    %1939 = vmatprep.subr.bf16.mxu0 %v1317
    %1940 = vmatpush1.bf16.msra.mxu0 %v1316
    %1941 = vmatprep.subr.bf16.mxu0 %v1321
    %1942 = vmatpush1.bf16.msra.mxu0 %v1320
    %1943 = vmatprep.mubr.bf16.mxu0 %v143
    %1944 = vmatmul.mubr.bf16.gmra.mrb[0].mxu0 %v142
    %v1945 = vpop.f32.mrb[0].mxu0
    %v1946 = vadd.f32 %v1905, %v1945
    %v1947 = vpop.f32.mrb[0].mxu0
    %v1948 = vadd.f32 %v1907, %v1947
    %v1949 = vpop.f32.mrb[0].mxu0
    %v1950 = vpop.f32.mrb[0].mxu0
    %1951 = vdwg.mxu0
    %1952 = vmatprep.subr.bf16.mxu0 %v1325
    %1953 = vmatpush1.bf16.msra.mxu0 %v1324
    %1954 = vmatprep.subr.bf16.mxu0 %v1329
    %1955 = vmatpush1.bf16.msra.mxu0 %v1328
    %1956 = vmatprep.subr.bf16.mxu0 %v1333
    %1957 = vmatpush1.bf16.msra.mxu0 %v1332
    %1958 = vmatprep.subr.bf16.mxu0 %v1337
    %1959 = vmatpush1.bf16.msra.mxu0 %v1336
    %1960 = vmatprep.subr.bf16.mxu0 %v1341
    %1961 = vmatpush1.bf16.msra.mxu0 %v1340
    %1962 = vmatprep.subr.bf16.mxu0 %v1345
    %1963 = vmatpush1.bf16.msra.mxu0 %v1344
    %1964 = vmatprep.subr.bf16.mxu0 %v1349
    %1965 = vmatpush1.bf16.msra.mxu0 %v1348
    %1966 = vmatprep.subr.bf16.mxu0 %v1353
    %1967 = vmatpush1.bf16.msra.mxu0 %v1352
    %1968 = vmatprep.subr.bf16.mxu0 %v1357
    %1969 = vmatpush1.bf16.msra.mxu0 %v1356
    %1970 = vmatprep.subr.bf16.mxu0 %v1361
    %1971 = vmatpush1.bf16.msra.mxu0 %v1360
    %1972 = vmatprep.subr.bf16.mxu0 %v1365
    %1973 = vmatpush1.bf16.msra.mxu0 %v1364
    %1974 = vmatprep.subr.bf16.mxu0 %v1369
    %1975 = vmatpush1.bf16.msra.mxu0 %v1368
    %1976 = vmatprep.subr.bf16.mxu0 %v1373
    %1977 = vmatpush1.bf16.msra.mxu0 %v1372
    %1978 = vmatprep.subr.bf16.mxu0 %v1377
    %1979 = vmatpush1.bf16.msra.mxu0 %v1376
    %1980 = vmatprep.subr.bf16.mxu0 %v1381
    %1981 = vmatpush1.bf16.msra.mxu0 %v1380
    %1982 = vmatprep.subr.bf16.mxu0 %v1385
    %1983 = vmatpush1.bf16.msra.mxu0 %v1384
    %1984 = vmatprep.mubr.bf16.mxu0 %v145
    %1985 = vmatmul.mubr.bf16.gmra.mrb[0].mxu0 %v144
    %v1986 = vpop.f32.mrb[0].mxu0
    %v1987 = vadd.f32 %v1946, %v1986
    %v1988 = vpop.f32.mrb[0].mxu0
    %v1989 = vadd.f32 %v1948, %v1988
    %v1990 = vpop.f32.mrb[0].mxu0
    %v1991 = vpop.f32.mrb[0].mxu0
    %1992 = vdwg.mxu0
    %1993 = vmatprep.subr.bf16.mxu0 %v1389
    %1994 = vmatpush1.bf16.msra.mxu0 %v1388
    %1995 = vmatprep.subr.bf16.mxu0 %v1393
    %1996 = vmatpush1.bf16.msra.mxu0 %v1392
    %1997 = vmatprep.subr.bf16.mxu0 %v1397
    %1998 = vmatpush1.bf16.msra.mxu0 %v1396
    %1999 = vmatprep.subr.bf16.mxu0 %v1401
    %2000 = vmatpush1.bf16.msra.mxu0 %v1400
    %2001 = vmatprep.subr.bf16.mxu0 %v1405
    %2002 = vmatpush1.bf16.msra.mxu0 %v1404
    %2003 = vmatprep.subr.bf16.mxu0 %v1409
    %2004 = vmatpush1.bf16.msra.mxu0 %v1408
    %2005 = vmatprep.subr.bf16.mxu0 %v1413
    %2006 = vmatpush1.bf16.msra.mxu0 %v1412
    %2007 = vmatprep.subr.bf16.mxu0 %v1417
    %2008 = vmatpush1.bf16.msra.mxu0 %v1416
    %2009 = vmatprep.subr.bf16.mxu0 %v1421
    %2010 = vmatpush1.bf16.msra.mxu0 %v1420
    %2011 = vmatprep.subr.bf16.mxu0 %v1425
    %2012 = vmatpush1.bf16.msra.mxu0 %v1424
    %2013 = vmatprep.subr.bf16.mxu0 %v1429
    %2014 = vmatpush1.bf16.msra.mxu0 %v1428
    %2015 = vmatprep.subr.bf16.mxu0 %v1433
    %2016 = vmatpush1.bf16.msra.mxu0 %v1432
    %2017 = vmatprep.subr.bf16.mxu0 %v1437
    %2018 = vmatpush1.bf16.msra.mxu0 %v1436
    %2019 = vmatprep.subr.bf16.mxu0 %v1441
    %2020 = vmatpush1.bf16.msra.mxu0 %v1440
    %2021 = vmatprep.subr.bf16.mxu0 %v1445
    %2022 = vmatpush1.bf16.msra.mxu0 %v1444
    %2023 = vmatprep.subr.bf16.mxu0 %v1449
    %2024 = vmatpush1.bf16.msra.mxu0 %v1448
    %2025 = vmatprep.mubr.bf16.mxu0 %v147
    %2026 = vmatmul.mubr.bf16.gmra.mrb[0].mxu0 %v146
    %v2027 = vpop.f32.mrb[0].mxu0
    %v2028 = vadd.f32 %v1987, %v2027
    %v2029 = vpop.f32.mrb[0].mxu0
    %v2030 = vadd.f32 %v1989, %v2029
    %v2031 = vpop.f32.mrb[0].mxu0
    %v2032 = vpop.f32.mrb[0].mxu0
    %2033 = vdwg.mxu0
    %v2034 = vmax.f32 %v1864, 0.0
    %v2035 = vmax.f32 %v1866, 0.0
    %v2036 = vmax.f32 %v2028, 0.0
    %v2037 = vmax.f32 %v2030, 0.0
    %v2038 = vpack.c.bf16 %v2034, %v2034
    %v2039 = vpack.c.bf16 %v2035, %v2035
    %v2040 = vpack.c.bf16 %v2036, %v2036
    %v2041 = vpack.c.bf16 %v2037, %v2037
    %v2042 = vld [vmem:[#allocation4] sm:$0xff]
    %v2043 = vld [vmem:[#allocation4 + $0x8] sm:$0xff]
    %v2044 = vld [vmem:[#allocation4 + $0x10] sm:$0xff]
    %v2045 = vld [vmem:[#allocation4 + $0x18] sm:$0xff]
    %v2046 = vld [vmem:[#allocation4 + $0x20] sm:$0xff]
    %v2047 = vld [vmem:[#allocation4 + $0x28] sm:$0xff]
    %v2048 = vld [vmem:[#allocation4 + $0x30] sm:$0xff]
    %v2049 = vld [vmem:[#allocation4 + $0x38] sm:$0xff]
    %v2050 = vld [vmem:[#allocation4 + $0x40] sm:$0xff]
    %v2051 = vld [vmem:[#allocation4 + $0x48] sm:$0xff]
    %v2052 = vld [vmem:[#allocation4 + $0x50] sm:$0xff]
    %v2053 = vld [vmem:[#allocation4 + $0x58] sm:$0xff]
    %v2054 = vld [vmem:[#allocation4 + $0x60] sm:$0xff]
    %v2055 = vld [vmem:[#allocation4 + $0x68] sm:$0xff]
    %v2056 = vld [vmem:[#allocation4 + $0x70] sm:$0xff]
    %v2057 = vld [vmem:[#allocation4 + $0x78] sm:$0xff]
    %v2058 = vld [vmem:[#allocation4 + $0x80] sm:$0xff]
    %v2059 = vld [vmem:[#allocation4 + $0x88] sm:$0xff]
    %v2060 = vld [vmem:[#allocation4 + $0x90] sm:$0xff]
    %v2061 = vld [vmem:[#allocation4 + $0x98] sm:$0xff]
    %v2062 = vld [vmem:[#allocation4 + $0xa0] sm:$0xff]
    %v2063 = vld [vmem:[#allocation4 + $0xa8] sm:$0xff]
    %v2064 = vld [vmem:[#allocation4 + $0xb0] sm:$0xff]
    %v2065 = vld [vmem:[#allocation4 + $0xb8] sm:$0xff]
    %v2066 = vld [vmem:[#allocation4 + $0xc0] sm:$0xff]
    %v2067 = vld [vmem:[#allocation4 + $0xc8] sm:$0xff]
    %v2068 = vld [vmem:[#allocation4 + $0xd0] sm:$0xff]
    %v2069 = vld [vmem:[#allocation4 + $0xd8] sm:$0xff]
    %v2070 = vld [vmem:[#allocation4 + $0xe0] sm:$0xff]
    %v2071 = vld [vmem:[#allocation4 + $0xe8] sm:$0xff]
    %v2072 = vld [vmem:[#allocation4 + $0xf0] sm:$0xff]
    %v2073 = vld [vmem:[#allocation4 + $0xf8] sm:$0xff]
    %v2074 = vld [vmem:[#allocation4 + $0x100] sm:$0xff]
    %v2075 = vld [vmem:[#allocation4 + $0x108] sm:$0xff]
    %v2076 = vld [vmem:[#allocation4 + $0x110] sm:$0xff]
    %v2077 = vld [vmem:[#allocation4 + $0x118] sm:$0xff]
    %v2078 = vld [vmem:[#allocation4 + $0x120] sm:$0xff]
    %v2079 = vld [vmem:[#allocation4 + $0x128] sm:$0xff]
    %v2080 = vld [vmem:[#allocation4 + $0x130] sm:$0xff]
    %v2081 = vld [vmem:[#allocation4 + $0x138] sm:$0xff]
    %v2082 = vld [vmem:[#allocation4 + $0x140] sm:$0xff]
    %v2083 = vld [vmem:[#allocation4 + $0x148] sm:$0xff]
    %v2084 = vld [vmem:[#allocation4 + $0x150] sm:$0xff]
    %v2085 = vld [vmem:[#allocation4 + $0x158] sm:$0xff]
    %v2086 = vld [vmem:[#allocation4 + $0x160] sm:$0xff]
    %v2087 = vld [vmem:[#allocation4 + $0x168] sm:$0xff]
    %v2088 = vld [vmem:[#allocation4 + $0x170] sm:$0xff]
    %v2089 = vld [vmem:[#allocation4 + $0x178] sm:$0xff]
    %v2090 = vld [vmem:[#allocation4 + $0x180] sm:$0xff]
    %v2091 = vld [vmem:[#allocation4 + $0x188] sm:$0xff]
    %v2092 = vld [vmem:[#allocation4 + $0x190] sm:$0xff]
    %v2093 = vld [vmem:[#allocation4 + $0x198] sm:$0xff]
    %v2094 = vld [vmem:[#allocation4 + $0x1a0] sm:$0xff]
    %v2095 = vld [vmem:[#allocation4 + $0x1a8] sm:$0xff]
    %v2096 = vld [vmem:[#allocation4 + $0x1b0] sm:$0xff]
    %v2097 = vld [vmem:[#allocation4 + $0x1b8] sm:$0xff]
    %v2098 = vld [vmem:[#allocation4 + $0x1c0] sm:$0xff]
    %v2099 = vld [vmem:[#allocation4 + $0x1c8] sm:$0xff]
    %v2100 = vld [vmem:[#allocation4 + $0x1d0] sm:$0xff]
    %v2101 = vld [vmem:[#allocation4 + $0x1d8] sm:$0xff]
    %v2102 = vld [vmem:[#allocation4 + $0x1e0] sm:$0xff]
    %v2103 = vld [vmem:[#allocation4 + $0x1e8] sm:$0xff]
    %v2104 = vld [vmem:[#allocation4 + $0x1f0] sm:$0xff]
    %v2105 = vld [vmem:[#allocation4 + $0x1f8] sm:$0xff]
    %v2106 = vld [vmem:[%s4] sm:$0x3]
    %v2108 = vlaneseq
    %v2109 = vshrl.u32 %v2108, 7
    %v2110 = vsub.s32 0, %v2109
    %v2111 = vrot.slane %v2106, %v2110
    %v2112 = vlaneseq
    %v2113 = vshrl.u32 %v2112, 7
    %v2114 = vsub.s32 1, %v2113
    %v2115 = vrot.slane %v2106, %v2114
    %v2182 = vunpack.c.l.b16 %v2042
    %v2183 = vunpack.c.h.b16 %v2042
    %v2184 = vunpack.c.l.b16 %v2043
    %v2185 = vunpack.c.h.b16 %v2043
    %v2186 = vunpack.c.l.b16 %v2044
    %v2187 = vunpack.c.h.b16 %v2044
    %v2188 = vunpack.c.l.b16 %v2045
    %v2189 = vunpack.c.h.b16 %v2045
    %v2190 = vunpack.c.l.b16 %v2046
    %v2191 = vunpack.c.h.b16 %v2046
    %v2192 = vunpack.c.l.b16 %v2047
    %v2193 = vunpack.c.h.b16 %v2047
    %v2194 = vunpack.c.l.b16 %v2048
    %v2195 = vunpack.c.h.b16 %v2048
    %v2196 = vunpack.c.l.b16 %v2049
    %v2197 = vunpack.c.h.b16 %v2049
    %v2198 = vunpack.c.l.b16 %v2050
    %v2199 = vunpack.c.h.b16 %v2050
    %v2200 = vunpack.c.l.b16 %v2051
    %v2201 = vunpack.c.h.b16 %v2051
    %v2202 = vunpack.c.l.b16 %v2052
    %v2203 = vunpack.c.h.b16 %v2052
    %v2204 = vunpack.c.l.b16 %v2053
    %v2205 = vunpack.c.h.b16 %v2053
    %v2206 = vunpack.c.l.b16 %v2054
    %v2207 = vunpack.c.h.b16 %v2054
    %v2208 = vunpack.c.l.b16 %v2055
    %v2209 = vunpack.c.h.b16 %v2055
    %v2210 = vunpack.c.l.b16 %v2056
    %v2211 = vunpack.c.h.b16 %v2056
    %v2212 = vunpack.c.l.b16 %v2057
    %v2213 = vunpack.c.h.b16 %v2057
    %v2214 = vunpack.c.l.b16 %v2058
    %v2215 = vunpack.c.h.b16 %v2058
    %v2216 = vunpack.c.l.b16 %v2059
    %v2217 = vunpack.c.h.b16 %v2059
    %v2218 = vunpack.c.l.b16 %v2060
    %v2219 = vunpack.c.h.b16 %v2060
    %v2220 = vunpack.c.l.b16 %v2061
    %v2221 = vunpack.c.h.b16 %v2061
    %v2222 = vunpack.c.l.b16 %v2062
    %v2223 = vunpack.c.h.b16 %v2062
    %v2224 = vunpack.c.l.b16 %v2063
    %v2225 = vunpack.c.h.b16 %v2063
    %v2226 = vunpack.c.l.b16 %v2064
    %v2227 = vunpack.c.h.b16 %v2064
    %v2228 = vunpack.c.l.b16 %v2065
    %v2229 = vunpack.c.h.b16 %v2065
    %v2230 = vunpack.c.l.b16 %v2066
    %v2231 = vunpack.c.h.b16 %v2066
    %v2232 = vunpack.c.l.b16 %v2067
    %v2233 = vunpack.c.h.b16 %v2067
    %v2234 = vunpack.c.l.b16 %v2068
    %v2235 = vunpack.c.h.b16 %v2068
    %v2236 = vunpack.c.l.b16 %v2069
    %v2237 = vunpack.c.h.b16 %v2069
    %v2238 = vunpack.c.l.b16 %v2070
    %v2239 = vunpack.c.h.b16 %v2070
    %v2240 = vunpack.c.l.b16 %v2071
    %v2241 = vunpack.c.h.b16 %v2071
    %v2242 = vunpack.c.l.b16 %v2072
    %v2243 = vunpack.c.h.b16 %v2072
    %v2244 = vunpack.c.l.b16 %v2073
    %v2245 = vunpack.c.h.b16 %v2073
    %v2246 = vunpack.c.l.b16 %v2074
    %v2247 = vunpack.c.h.b16 %v2074
    %v2248 = vunpack.c.l.b16 %v2075
    %v2249 = vunpack.c.h.b16 %v2075
    %v2250 = vunpack.c.l.b16 %v2076
    %v2251 = vunpack.c.h.b16 %v2076
    %v2252 = vunpack.c.l.b16 %v2077
    %v2253 = vunpack.c.h.b16 %v2077
    %v2254 = vunpack.c.l.b16 %v2078
    %v2255 = vunpack.c.h.b16 %v2078
    %v2256 = vunpack.c.l.b16 %v2079
    %v2257 = vunpack.c.h.b16 %v2079
    %v2258 = vunpack.c.l.b16 %v2080
    %v2259 = vunpack.c.h.b16 %v2080
    %v2260 = vunpack.c.l.b16 %v2081
    %v2261 = vunpack.c.h.b16 %v2081
    %v2262 = vunpack.c.l.b16 %v2082
    %v2263 = vunpack.c.h.b16 %v2082
    %v2264 = vunpack.c.l.b16 %v2083
    %v2265 = vunpack.c.h.b16 %v2083
    %v2266 = vunpack.c.l.b16 %v2084
    %v2267 = vunpack.c.h.b16 %v2084
    %v2268 = vunpack.c.l.b16 %v2085
    %v2269 = vunpack.c.h.b16 %v2085
    %v2270 = vunpack.c.l.b16 %v2086
    %v2271 = vunpack.c.h.b16 %v2086
    %v2272 = vunpack.c.l.b16 %v2087
    %v2273 = vunpack.c.h.b16 %v2087
    %v2274 = vunpack.c.l.b16 %v2088
    %v2275 = vunpack.c.h.b16 %v2088
    %v2276 = vunpack.c.l.b16 %v2089
    %v2277 = vunpack.c.h.b16 %v2089
    %v2278 = vunpack.c.l.b16 %v2090
    %v2279 = vunpack.c.h.b16 %v2090
    %v2280 = vunpack.c.l.b16 %v2091
    %v2281 = vunpack.c.h.b16 %v2091
    %v2282 = vunpack.c.l.b16 %v2092
    %v2283 = vunpack.c.h.b16 %v2092
    %v2284 = vunpack.c.l.b16 %v2093
    %v2285 = vunpack.c.h.b16 %v2093
    %v2286 = vunpack.c.l.b16 %v2094
    %v2287 = vunpack.c.h.b16 %v2094
    %v2288 = vunpack.c.l.b16 %v2095
    %v2289 = vunpack.c.h.b16 %v2095
    %v2290 = vunpack.c.l.b16 %v2096
    %v2291 = vunpack.c.h.b16 %v2096
    %v2292 = vunpack.c.l.b16 %v2097
    %v2293 = vunpack.c.h.b16 %v2097
    %v2294 = vunpack.c.l.b16 %v2098
    %v2295 = vunpack.c.h.b16 %v2098
    %v2296 = vunpack.c.l.b16 %v2099
    %v2297 = vunpack.c.h.b16 %v2099
    %v2298 = vunpack.c.l.b16 %v2100
    %v2299 = vunpack.c.h.b16 %v2100
    %v2300 = vunpack.c.l.b16 %v2101
    %v2301 = vunpack.c.h.b16 %v2101
    %v2302 = vunpack.c.l.b16 %v2102
    %v2303 = vunpack.c.h.b16 %v2102
    %v2304 = vunpack.c.l.b16 %v2103
    %v2305 = vunpack.c.h.b16 %v2103
    %v2306 = vunpack.c.l.b16 %v2104
    %v2307 = vunpack.c.h.b16 %v2104
    %v2308 = vunpack.c.l.b16 %v2105
    %v2309 = vunpack.c.h.b16 %v2105
    %v2310 = vpack.c.b16 %v2184, %v2182
    %v2311 = vpack.c.b16 %v2185, %v2183
    %v2312 = vpack.c.b16 %v2188, %v2186
    %v2313 = vpack.c.b16 %v2189, %v2187
    %v2314 = vpack.c.b16 %v2192, %v2190
    %v2315 = vpack.c.b16 %v2193, %v2191
    %v2316 = vpack.c.b16 %v2196, %v2194
    %v2317 = vpack.c.b16 %v2197, %v2195
    %v2318 = vpack.c.b16 %v2200, %v2198
    %v2319 = vpack.c.b16 %v2201, %v2199
    %v2320 = vpack.c.b16 %v2204, %v2202
    %v2321 = vpack.c.b16 %v2205, %v2203
    %v2322 = vpack.c.b16 %v2208, %v2206
    %v2323 = vpack.c.b16 %v2209, %v2207
    %v2324 = vpack.c.b16 %v2212, %v2210
    %v2325 = vpack.c.b16 %v2213, %v2211
    %v2326 = vpack.c.b16 %v2216, %v2214
    %v2327 = vpack.c.b16 %v2217, %v2215
    %v2328 = vpack.c.b16 %v2220, %v2218
    %v2329 = vpack.c.b16 %v2221, %v2219
    %v2330 = vpack.c.b16 %v2224, %v2222
    %v2331 = vpack.c.b16 %v2225, %v2223
    %v2332 = vpack.c.b16 %v2228, %v2226
    %v2333 = vpack.c.b16 %v2229, %v2227
    %v2334 = vpack.c.b16 %v2232, %v2230
    %v2335 = vpack.c.b16 %v2233, %v2231
    %v2336 = vpack.c.b16 %v2236, %v2234
    %v2337 = vpack.c.b16 %v2237, %v2235
    %v2338 = vpack.c.b16 %v2240, %v2238
    %v2339 = vpack.c.b16 %v2241, %v2239
    %v2340 = vpack.c.b16 %v2244, %v2242
    %v2341 = vpack.c.b16 %v2245, %v2243
    %v2342 = vpack.c.b16 %v2248, %v2246
    %v2343 = vpack.c.b16 %v2249, %v2247
    %v2344 = vpack.c.b16 %v2252, %v2250
    %v2345 = vpack.c.b16 %v2253, %v2251
    %v2346 = vpack.c.b16 %v2256, %v2254
    %v2347 = vpack.c.b16 %v2257, %v2255
    %v2348 = vpack.c.b16 %v2260, %v2258
    %v2349 = vpack.c.b16 %v2261, %v2259
    %v2350 = vpack.c.b16 %v2264, %v2262
    %v2351 = vpack.c.b16 %v2265, %v2263
    %v2352 = vpack.c.b16 %v2268, %v2266
    %v2353 = vpack.c.b16 %v2269, %v2267
    %v2354 = vpack.c.b16 %v2272, %v2270
    %v2355 = vpack.c.b16 %v2273, %v2271
    %v2356 = vpack.c.b16 %v2276, %v2274
    %v2357 = vpack.c.b16 %v2277, %v2275
    %v2358 = vpack.c.b16 %v2280, %v2278
    %v2359 = vpack.c.b16 %v2281, %v2279
    %v2360 = vpack.c.b16 %v2284, %v2282
    %v2361 = vpack.c.b16 %v2285, %v2283
    %v2362 = vpack.c.b16 %v2288, %v2286
    %v2363 = vpack.c.b16 %v2289, %v2287
    %v2364 = vpack.c.b16 %v2292, %v2290
    %v2365 = vpack.c.b16 %v2293, %v2291
    %v2366 = vpack.c.b16 %v2296, %v2294
    %v2367 = vpack.c.b16 %v2297, %v2295
    %v2368 = vpack.c.b16 %v2300, %v2298
    %v2369 = vpack.c.b16 %v2301, %v2299
    %v2370 = vpack.c.b16 %v2304, %v2302
    %v2371 = vpack.c.b16 %v2305, %v2303
    %v2372 = vpack.c.b16 %v2308, %v2306
    %v2373 = vpack.c.b16 %v2309, %v2307
    %2438 = vmatprep.subr.bf16.mxu0 %v2311
    %2439 = vmatpush1.bf16.msra.mxu0 %v2310
    %2440 = vmatprep.subr.bf16.mxu0 %v2313
    %2441 = vmatpush1.bf16.msra.mxu0 %v2312
    %2442 = vmatprep.subr.bf16.mxu0 %v2315
    %2443 = vmatpush1.bf16.msra.mxu0 %v2314
    %2444 = vmatprep.subr.bf16.mxu0 %v2317
    %2445 = vmatpush1.bf16.msra.mxu0 %v2316
    %2446 = vmatprep.subr.bf16.mxu0 %v2319
    %2447 = vmatpush1.bf16.msra.mxu0 %v2318
    %2448 = vmatprep.subr.bf16.mxu0 %v2321
    %2449 = vmatpush1.bf16.msra.mxu0 %v2320
    %2450 = vmatprep.subr.bf16.mxu0 %v2323
    %2451 = vmatpush1.bf16.msra.mxu0 %v2322
    %2452 = vmatprep.subr.bf16.mxu0 %v2325
    %2453 = vmatpush1.bf16.msra.mxu0 %v2324
    %2454 = vmatprep.subr.bf16.mxu0 %v2327
    %2455 = vmatpush1.bf16.msra.mxu0 %v2326
    %2456 = vmatprep.subr.bf16.mxu0 %v2329
    %2457 = vmatpush1.bf16.msra.mxu0 %v2328
    %2458 = vmatprep.subr.bf16.mxu0 %v2331
    %2459 = vmatpush1.bf16.msra.mxu0 %v2330
    %2460 = vmatprep.subr.bf16.mxu0 %v2333
    %2461 = vmatpush1.bf16.msra.mxu0 %v2332
    %2462 = vmatprep.subr.bf16.mxu0 %v2335
    %2463 = vmatpush1.bf16.msra.mxu0 %v2334
    %2464 = vmatprep.subr.bf16.mxu0 %v2337
    %2465 = vmatpush1.bf16.msra.mxu0 %v2336
    %2466 = vmatprep.subr.bf16.mxu0 %v2339
    %2467 = vmatpush1.bf16.msra.mxu0 %v2338
    %2468 = vmatprep.subr.bf16.mxu0 %v2341
    %2469 = vmatpush1.bf16.msra.mxu0 %v2340
    %2470 = vmatprep.mubr.bf16.mxu0 %v2039
    %2471 = vmatmul.mubr.bf16.gmra.mrb[0].mxu0 %v2038
    %v2472 = vpop.f32.mrb[0].mxu0
    %v2473 = vadd.f32 %v2111, %v2472
    %v2474 = vpop.f32.mrb[0].mxu0
    %v2475 = vadd.f32 %v2115, %v2474
    %v2476 = vpop.f32.mrb[0].mxu0
    %v2477 = vpop.f32.mrb[0].mxu0
    %2478 = vdwg.mxu0
    %2479 = vmatprep.subr.bf16.mxu0 %v2343
    %2480 = vmatpush1.bf16.msra.mxu0 %v2342
    %2481 = vmatprep.subr.bf16.mxu0 %v2345
    %2482 = vmatpush1.bf16.msra.mxu0 %v2344
    %2483 = vmatprep.subr.bf16.mxu0 %v2347
    %2484 = vmatpush1.bf16.msra.mxu0 %v2346
    %2485 = vmatprep.subr.bf16.mxu0 %v2349
    %2486 = vmatpush1.bf16.msra.mxu0 %v2348
    %2487 = vmatprep.subr.bf16.mxu0 %v2351
    %2488 = vmatpush1.bf16.msra.mxu0 %v2350
    %2489 = vmatprep.subr.bf16.mxu0 %v2353
    %2490 = vmatpush1.bf16.msra.mxu0 %v2352
    %2491 = vmatprep.subr.bf16.mxu0 %v2355
    %2492 = vmatpush1.bf16.msra.mxu0 %v2354
    %2493 = vmatprep.subr.bf16.mxu0 %v2357
    %2494 = vmatpush1.bf16.msra.mxu0 %v2356
    %2495 = vmatprep.subr.bf16.mxu0 %v2359
    %2496 = vmatpush1.bf16.msra.mxu0 %v2358
    %2497 = vmatprep.subr.bf16.mxu0 %v2361
    %2498 = vmatpush1.bf16.msra.mxu0 %v2360
    %2499 = vmatprep.subr.bf16.mxu0 %v2363
    %2500 = vmatpush1.bf16.msra.mxu0 %v2362
    %2501 = vmatprep.subr.bf16.mxu0 %v2365
    %2502 = vmatpush1.bf16.msra.mxu0 %v2364
    %2503 = vmatprep.subr.bf16.mxu0 %v2367
    %2504 = vmatpush1.bf16.msra.mxu0 %v2366
    %2505 = vmatprep.subr.bf16.mxu0 %v2369
    %2506 = vmatpush1.bf16.msra.mxu0 %v2368
    %2507 = vmatprep.subr.bf16.mxu0 %v2371
    %2508 = vmatpush1.bf16.msra.mxu0 %v2370
    %2509 = vmatprep.subr.bf16.mxu0 %v2373
    %2510 = vmatpush1.bf16.msra.mxu0 %v2372
    %2511 = vmatprep.mubr.bf16.mxu0 %v2041
    %2512 = vmatmul.mubr.bf16.gmra.mrb[0].mxu0 %v2040
    %v2513 = vpop.f32.mrb[0].mxu0
    %v2514 = vadd.f32 %v2473, %v2513
    %v2515 = vpop.f32.mrb[0].mxu0
    %v2516 = vadd.f32 %v2475, %v2515
    %v2517 = vpop.f32.mrb[0].mxu0
    %v2518 = vpop.f32.mrb[0].mxu0
    %2519 = vdwg.mxu0
    %v2520 = vmax.f32 %v2514, 0.0
    %v2521 = vmax.f32 %v2516, 0.0
    %v2522 = vpack.c.bf16 %v2520, %v2520
    %v2523 = vpack.c.bf16 %v2521, %v2521
    %v2524 = vld [vmem:[%s5] sm:$0xf]
    %v2525 = vld [vmem:[%s5 + $0x4] sm:$0xf]
    %v2526 = vld [vmem:[%s5 + $0x8] sm:$0xf]
    %v2527 = vld [vmem:[%s5 + $0xc] sm:$0xf]
    %v2528 = vld [vmem:[%s5 + $0x10] sm:$0xf]
    %v2529 = vld [vmem:[%s5 + $0x14] sm:$0xf]
    %v2530 = vld [vmem:[%s5 + $0x18] sm:$0xf]
    %v2531 = vld [vmem:[%s5 + $0x1c] sm:$0xf]
    %v2532 = vld [vmem:[%s5 + $0x20] sm:$0xf]
    %v2533 = vld [vmem:[%s5 + $0x24] sm:$0xf]
    %v2534 = vld [vmem:[%s5 + $0x28] sm:$0xf]
    %v2535 = vld [vmem:[%s5 + $0x2c] sm:$0xf]
    %v2536 = vld [vmem:[%s5 + $0x30] sm:$0xf]
    %v2537 = vld [vmem:[%s5 + $0x34] sm:$0xf]
    %v2538 = vld [vmem:[%s5 + $0x38] sm:$0xf]
    %v2539 = vld [vmem:[%s5 + $0x3c] sm:$0xf]
    %v2540 = vld [vmem:[%s5 + $0x40] sm:$0xf]
    %v2541 = vld [vmem:[%s5 + $0x44] sm:$0xf]
    %v2542 = vld [vmem:[%s5 + $0x48] sm:$0xf]
    %v2543 = vld [vmem:[%s5 + $0x4c] sm:$0xf]
    %v2544 = vld [vmem:[%s5 + $0x50] sm:$0xf]
    %v2545 = vld [vmem:[%s5 + $0x54] sm:$0xf]
    %v2546 = vld [vmem:[%s5 + $0x58] sm:$0xf]
    %v2547 = vld [vmem:[%s5 + $0x5c] sm:$0xf]
    %v2548 = vld [vmem:[%s5 + $0x60] sm:$0xf]
    %v2549 = vld [vmem:[%s5 + $0x64] sm:$0xf]
    %v2550 = vld [vmem:[%s5 + $0x68] sm:$0xf]
    %v2551 = vld [vmem:[%s5 + $0x6c] sm:$0xf]
    %v2552 = vld [vmem:[%s5 + $0x70] sm:$0xf]
    %v2553 = vld [vmem:[%s5 + $0x74] sm:$0xf]
    %v2554 = vld [vmem:[%s5 + $0x78] sm:$0xf]
    %v2555 = vld [vmem:[%s5 + $0x7c] sm:$0xf]
    %v2556 = vld [vmem:[%s6] sm:$0x1]
    %v2558 = vlaneseq
    %v2559 = vshrl.u32 %v2558, 7
    %v2560 = vsub.s32 0, %v2559
    %v2561 = vrot.slane %v2556, %v2560
    %v2595 = vunpack.c.l.b16 %v2524
    %v2596 = vunpack.c.l.b16 %v2525
    %v2597 = vunpack.c.l.b16 %v2526
    %v2598 = vunpack.c.l.b16 %v2527
    %v2599 = vunpack.c.l.b16 %v2528
    %v2600 = vunpack.c.l.b16 %v2529
    %v2601 = vunpack.c.l.b16 %v2530
    %v2602 = vunpack.c.l.b16 %v2531
    %v2603 = vunpack.c.l.b16 %v2532
    %v2604 = vunpack.c.l.b16 %v2533
    %v2605 = vunpack.c.l.b16 %v2534
    %v2606 = vunpack.c.l.b16 %v2535
    %v2607 = vunpack.c.l.b16 %v2536
    %v2608 = vunpack.c.l.b16 %v2537
    %v2609 = vunpack.c.l.b16 %v2538
    %v2610 = vunpack.c.l.b16 %v2539
    %v2611 = vunpack.c.l.b16 %v2540
    %v2612 = vunpack.c.l.b16 %v2541
    %v2613 = vunpack.c.l.b16 %v2542
    %v2614 = vunpack.c.l.b16 %v2543
    %v2615 = vunpack.c.l.b16 %v2544
    %v2616 = vunpack.c.l.b16 %v2545
    %v2617 = vunpack.c.l.b16 %v2546
    %v2618 = vunpack.c.l.b16 %v2547
    %v2619 = vunpack.c.l.b16 %v2548
    %v2620 = vunpack.c.l.b16 %v2549
    %v2621 = vunpack.c.l.b16 %v2550
    %v2622 = vunpack.c.l.b16 %v2551
    %v2623 = vunpack.c.l.b16 %v2552
    %v2624 = vunpack.c.l.b16 %v2553
    %v2625 = vunpack.c.l.b16 %v2554
    %v2626 = vunpack.c.l.b16 %v2555
    %v2627 = vpack.c.b16 %v2596, %v2595
    %v2628 = vpack.c.b16 %v2598, %v2597
    %v2629 = vpack.c.b16 %v2600, %v2599
    %v2630 = vpack.c.b16 %v2602, %v2601
    %v2631 = vpack.c.b16 %v2604, %v2603
    %v2632 = vpack.c.b16 %v2606, %v2605
    %v2633 = vpack.c.b16 %v2608, %v2607
    %v2634 = vpack.c.b16 %v2610, %v2609
    %v2635 = vpack.c.b16 %v2612, %v2611
    %v2636 = vpack.c.b16 %v2614, %v2613
    %v2637 = vpack.c.b16 %v2616, %v2615
    %v2638 = vpack.c.b16 %v2618, %v2617
    %v2639 = vpack.c.b16 %v2620, %v2619
    %v2640 = vpack.c.b16 %v2622, %v2621
    %v2641 = vpack.c.b16 %v2624, %v2623
    %v2642 = vpack.c.b16 %v2626, %v2625
    %2659 = vmatprep.subr.bf16.mxu0 0
    %2660 = vmatpush1.bf16.msra.mxu0 %v2627
    %2661 = vmatprep.subr.bf16.mxu0 0
    %2662 = vmatpush1.bf16.msra.mxu0 %v2628
    %2663 = vmatprep.subr.bf16.mxu0 0
    %2664 = vmatpush1.bf16.msra.mxu0 %v2629
    %2665 = vmatprep.subr.bf16.mxu0 0
    %2666 = vmatpush1.bf16.msra.mxu0 %v2630
    %2667 = vmatprep.subr.bf16.mxu0 0
    %2668 = vmatpush1.bf16.msra.mxu0 %v2631
    %2669 = vmatprep.subr.bf16.mxu0 0
    %2670 = vmatpush1.bf16.msra.mxu0 %v2632
    %2671 = vmatprep.subr.bf16.mxu0 0
    %2672 = vmatpush1.bf16.msra.mxu0 %v2633
    %2673 = vmatprep.subr.bf16.mxu0 0
    %2674 = vmatpush1.bf16.msra.mxu0 %v2634
    %2675 = vmatprep.subr.bf16.mxu0 0
    %2676 = vmatpush1.bf16.msra.mxu0 %v2635
    %2677 = vmatprep.subr.bf16.mxu0 0
    %2678 = vmatpush1.bf16.msra.mxu0 %v2636
    %2679 = vmatprep.subr.bf16.mxu0 0
    %2680 = vmatpush1.bf16.msra.mxu0 %v2637
    %2681 = vmatprep.subr.bf16.mxu0 0
    %2682 = vmatpush1.bf16.msra.mxu0 %v2638
    %2683 = vmatprep.subr.bf16.mxu0 0
    %2684 = vmatpush1.bf16.msra.mxu0 %v2639
    %2685 = vmatprep.subr.bf16.mxu0 0
    %2686 = vmatpush1.bf16.msra.mxu0 %v2640
    %2687 = vmatprep.subr.bf16.mxu0 0
    %2688 = vmatpush1.bf16.msra.mxu0 %v2641
    %2689 = vmatprep.subr.bf16.mxu0 0
    %2690 = vmatpush1.bf16.msra.mxu0 %v2642
    %2691 = vmatprep.mubr.bf16.mxu0 %v2523
    %2692 = vmatmul.mubr.bf16.gmra.mrb[0].mxu0 %v2522
    %v2693 = vpop.f32.mrb[0].mxu0
    %v2694 = vadd.f32 %v2561, %v2693
    %v2695 = vpop.f32.mrb[0].mxu0
    %v2696 = vpop.f32.mrb[0].mxu0
    %v2697 = vpop.f32.mrb[0].mxu0
    %2698 = vdwg.mxu0
    %v2699 = vmax.f32 %v2694, 0.0
    %v2700 = vpack.c.bf16 %v2699, %v2699
    %v2701 = vld [vmem:[#allocation6] sm:$0xf]
    %v2702 = vld [vmem:[#allocation6 + $0x4] sm:$0xf]
    %v2703 = vld [vmem:[#allocation6 + $0x8] sm:$0xf]
    %v2704 = vld [vmem:[#allocation6 + $0xc] sm:$0xf]
    %v2705 = vld [vmem:[#allocation6 + $0x10] sm:$0xf]
    %v2706 = vld [vmem:[#allocation6 + $0x14] sm:$0xf]
    %v2707 = vld [vmem:[#allocation6 + $0x18] sm:$0xf]
    %v2708 = vld [vmem:[#allocation6 + $0x1c] sm:$0xf]
    %v2709 = vld [vmem:[#allocation6 + $0x20] sm:$0xf]
    %v2710 = vld [vmem:[#allocation6 + $0x24] sm:$0xf]
    %v2711 = vld [vmem:[#allocation6 + $0x28] sm:$0xf]
    %v2712 = vld [vmem:[#allocation6 + $0x2c] sm:$0xf]
    %v2713 = vld [vmem:[#allocation6 + $0x30] sm:$0xf]
    %v2714 = vld [vmem:[#allocation6 + $0x34] sm:$0xf]
    %v2715 = vld [vmem:[#allocation6 + $0x38] sm:$0xf]
    %v2716 = vld [vmem:[#allocation6 + $0x3c] sm:$0xf]
    %v2717 = vld [vmem:[%s8] sm:$0x1]
    %v2719 = vlaneseq
    %v2720 = vshrl.u32 %v2719, 7
    %v2721 = vsub.s32 0, %v2720
    %v2722 = vrot.slane %v2717, %v2721
    %v2740 = vunpack.c.l.b16 %v2701
    %v2741 = vunpack.c.l.b16 %v2702
    %v2742 = vunpack.c.l.b16 %v2703
    %v2743 = vunpack.c.l.b16 %v2704
    %v2744 = vunpack.c.l.b16 %v2705
    %v2745 = vunpack.c.l.b16 %v2706
    %v2746 = vunpack.c.l.b16 %v2707
    %v2747 = vunpack.c.l.b16 %v2708
    %v2748 = vunpack.c.l.b16 %v2709
    %v2749 = vunpack.c.l.b16 %v2710
    %v2750 = vunpack.c.l.b16 %v2711
    %v2751 = vunpack.c.l.b16 %v2712
    %v2752 = vunpack.c.l.b16 %v2713
    %v2753 = vunpack.c.l.b16 %v2714
    %v2754 = vunpack.c.l.b16 %v2715
    %v2755 = vunpack.c.l.b16 %v2716
    %v2756 = vpack.c.b16 %v2741, %v2740
    %v2757 = vpack.c.b16 %v2743, %v2742
    %v2758 = vpack.c.b16 %v2745, %v2744
    %v2759 = vpack.c.b16 %v2747, %v2746
    %v2760 = vpack.c.b16 %v2749, %v2748
    %v2761 = vpack.c.b16 %v2751, %v2750
    %v2762 = vpack.c.b16 %v2753, %v2752
    %v2763 = vpack.c.b16 %v2755, %v2754
    %2772 = vmatprep.subr.bf16.mxu0 0
    %2773 = vmatpush1.bf16.msra.mxu0 %v2756
    %2774 = vmatprep.subr.bf16.mxu0 0
    %2775 = vmatpush1.bf16.msra.mxu0 %v2757
    %2776 = vmatprep.subr.bf16.mxu0 0
    %2777 = vmatpush1.bf16.msra.mxu0 %v2758
    %2778 = vmatprep.subr.bf16.mxu0 0
    %2779 = vmatpush1.bf16.msra.mxu0 %v2759
    %2780 = vmatprep.subr.bf16.mxu0 0
    %2781 = vmatpush1.bf16.msra.mxu0 %v2760
    %2782 = vmatprep.subr.bf16.mxu0 0
    %2783 = vmatpush1.bf16.msra.mxu0 %v2761
    %2784 = vmatprep.subr.bf16.mxu0 0
    %2785 = vmatpush1.bf16.msra.mxu0 %v2762
    %2786 = vmatprep.subr.bf16.mxu0 0
    %2787 = vmatpush1.bf16.msra.mxu0 %v2763
    %2788 = vmatprep.subr.bf16.mxu0 0
    %2789 = vmatpush1.bf16.msra.mxu0 0
    %2790 = vmatprep.subr.bf16.mxu0 0
    %2791 = vmatpush1.bf16.msra.mxu0 0
    %2792 = vmatprep.subr.bf16.mxu0 0
    %2793 = vmatpush1.bf16.msra.mxu0 0
    %2794 = vmatprep.subr.bf16.mxu0 0
    %2795 = vmatpush1.bf16.msra.mxu0 0
    %2796 = vmatprep.subr.bf16.mxu0 0
    %2797 = vmatpush1.bf16.msra.mxu0 0
    %2798 = vmatprep.subr.bf16.mxu0 0
    %2799 = vmatpush1.bf16.msra.mxu0 0
    %2800 = vmatprep.subr.bf16.mxu0 0
    %2801 = vmatpush1.bf16.msra.mxu0 0
    %2802 = vmatprep.subr.bf16.mxu0 0
    %2803 = vmatpush1.bf16.msra.mxu0 0
    %2804 = vmatprep.mubr.bf16.mxu0 0
    %2805 = vmatmul.mubr.bf16.gmra.mrb[0].mxu0 %v2700
    %v2806 = vpop.f32.mrb[0].mxu0
    %v2807 = vadd.f32 %v2722, %v2806
    %v2808 = vpop.f32.mrb[0].mxu0
    %v2809 = vpop.f32.mrb[0].mxu0
    %v2810 = vpop.f32.mrb[0].mxu0
    %2811 = vdwg.mxu0
    %v2812 = vtanh.pop %v2807
    %v2813 = vpack.c.bf16 %v2812, %v2812
    %v2814 = vld [vmem:[#allocation7] sm:$0xf]
    %v2815 = vld [vmem:[#allocation7 + $0x4] sm:$0xf]
    %v2816 = vld [vmem:[#allocation7 + $0x8] sm:$0xf]
    %v2817 = vld [vmem:[#allocation7 + $0xc] sm:$0xf]
    %v2818 = vld [vmem:[#allocation7 + $0x10] sm:$0xf]
    %v2819 = vld [vmem:[#allocation7 + $0x14] sm:$0xf]
    %v2820 = vld [vmem:[#allocation7 + $0x18] sm:$0xf]
    %v2821 = vld [vmem:[#allocation7 + $0x1c] sm:$0xf]
    %v2822 = vld [vmem:[#allocation7 + $0x20] sm:$0xf]
    %v2823 = vld [vmem:[#allocation7 + $0x24] sm:$0xf]
    %v2824 = vld [vmem:[#allocation7 + $0x28] sm:$0xf]
    %v2825 = vld [vmem:[#allocation7 + $0x2c] sm:$0xf]
    %v2826 = vld [vmem:[#allocation7 + $0x30] sm:$0xf]
    %v2827 = vld [vmem:[#allocation7 + $0x34] sm:$0xf]
    %v2828 = vld [vmem:[#allocation7 + $0x38] sm:$0xf]
    %v2829 = vld [vmem:[#allocation7 + $0x3c] sm:$0xf]
    %v2830 = vld [vmem:[%s10] sm:$0x1]
    %v2832 = vlaneseq
    %v2833 = vshrl.u32 %v2832, 7
    %v2834 = vsub.s32 0, %v2833
    %v2835 = vrot.slane %v2830, %v2834
    %v2853 = vunpack.c.l.b16 %v2814
    %v2854 = vunpack.c.l.b16 %v2815
    %v2855 = vunpack.c.l.b16 %v2816
    %v2856 = vunpack.c.l.b16 %v2817
    %v2857 = vunpack.c.l.b16 %v2818
    %v2858 = vunpack.c.l.b16 %v2819
    %v2859 = vunpack.c.l.b16 %v2820
    %v2860 = vunpack.c.l.b16 %v2821
    %v2861 = vunpack.c.l.b16 %v2822
    %v2862 = vunpack.c.l.b16 %v2823
    %v2863 = vunpack.c.l.b16 %v2824
    %v2864 = vunpack.c.l.b16 %v2825
    %v2865 = vunpack.c.l.b16 %v2826
    %v2866 = vunpack.c.l.b16 %v2827
    %v2867 = vunpack.c.l.b16 %v2828
    %v2868 = vunpack.c.l.b16 %v2829
    %v2869 = vpack.c.b16 %v2854, %v2853
    %v2870 = vpack.c.b16 %v2856, %v2855
    %v2871 = vpack.c.b16 %v2858, %v2857
    %v2872 = vpack.c.b16 %v2860, %v2859
    %v2873 = vpack.c.b16 %v2862, %v2861
    %v2874 = vpack.c.b16 %v2864, %v2863
    %v2875 = vpack.c.b16 %v2866, %v2865
    %v2876 = vpack.c.b16 %v2868, %v2867
    %2885 = vmatprep.subr.bf16.mxu0 0
    %2886 = vmatpush1.bf16.msra.mxu0 %v2869
    %2887 = vmatprep.subr.bf16.mxu0 0
    %2888 = vmatpush1.bf16.msra.mxu0 %v2870
    %2889 = vmatprep.subr.bf16.mxu0 0
    %2890 = vmatpush1.bf16.msra.mxu0 %v2871
    %2891 = vmatprep.subr.bf16.mxu0 0
    %2892 = vmatpush1.bf16.msra.mxu0 %v2872
    %2893 = vmatprep.subr.bf16.mxu0 0
    %2894 = vmatpush1.bf16.msra.mxu0 %v2873
    %2895 = vmatprep.subr.bf16.mxu0 0
    %2896 = vmatpush1.bf16.msra.mxu0 %v2874
    %2897 = vmatprep.subr.bf16.mxu0 0
    %2898 = vmatpush1.bf16.msra.mxu0 %v2875
    %2899 = vmatprep.subr.bf16.mxu0 0
    %2900 = vmatpush1.bf16.msra.mxu0 %v2876
    %2901 = vmatprep.subr.bf16.mxu0 0
    %2902 = vmatpush1.bf16.msra.mxu0 0
    %2903 = vmatprep.subr.bf16.mxu0 0
    %2904 = vmatpush1.bf16.msra.mxu0 0
    %2905 = vmatprep.subr.bf16.mxu0 0
    %2906 = vmatpush1.bf16.msra.mxu0 0
    %2907 = vmatprep.subr.bf16.mxu0 0
    %2908 = vmatpush1.bf16.msra.mxu0 0
    %2909 = vmatprep.subr.bf16.mxu0 0
    %2910 = vmatpush1.bf16.msra.mxu0 0
    %2911 = vmatprep.subr.bf16.mxu0 0
    %2912 = vmatpush1.bf16.msra.mxu0 0
    %2913 = vmatprep.subr.bf16.mxu0 0
    %2914 = vmatpush1.bf16.msra.mxu0 0
    %2915 = vmatprep.subr.bf16.mxu0 0
    %2916 = vmatpush1.bf16.msra.mxu0 0
    %2917 = vmatprep.mubr.bf16.mxu0 0
    %2918 = vmatmul.mubr.bf16.gmra.mrb[0].mxu0 %v2813
    %v2919 = vpop.f32.mrb[0].mxu0
    %v2920 = vadd.f32 %v2835, %v2919
    %v2921 = vpop.f32.mrb[0].mxu0
    %v2922 = vpop.f32.mrb[0].mxu0
    %v2923 = vpop.f32.mrb[0].mxu0
    %2924 = vdwg.mxu0
    %2925 = vst [vmem:[%s11] sm:$0x3] %v2920
    // Predicated region
    $region62: #{critic_forward.1} parent=1 // pred_check
      _
    $region63: #{critic_forward.1} parent=1 // pred_check_branch
      %2927 = sbr.rel (0) target = $region65
    $region64: #{critic_forward.1} parent=1 // pred_region
      _
    $region65: #{critic_forward.1} parent=1 // pred_fallthru
      _
    // Predicated region
    $region66: #{critic_forward.1} parent=1 // pred_check
      _
    $region67: #{critic_forward.1} parent=1 // pred_check_branch
      %2929 = sbr.rel (0) target = $region69
    $region68: #{critic_forward.1} parent=1 // pred_region
      _
    $region69: #{critic_forward.1} parent=1 // pred_fallthru
      _
    %2930 = vsyncpa [#allocation3], 1
    %2931 = vsyncpa [#allocation5], 1
    %2932 = vsyncpa [#allocation8], 1

</llo_original>
